<compile_context>
chip_gen: v7x
topology: tpu7x:2x2x1
jax: 0.10.0
libtpu: 0.0.40
codegen_flags: <defaults>
</compile_context>

<pallas_src>
import functools

import jax
import jax.numpy as jnp
from jax import lax
from jax.experimental import pallas as pl
from jax.experimental.pallas import tpu as pltpu


# ----------------------------------------------------------------------------
# Pallas kernel: one (seq_tile, H) slab of one batch element per grid step.
# ----------------------------------------------------------------------------
def _rwkv_block_kernel(x_ref, vec_ref, aux_ref, *refs, fused, C):
    Tt, H = x_ref.shape
    H2 = 2 * H
    n_chunks = Tt // C
    log2c = C.bit_length() - 1          # C is 8 or 16 (power of two)

    if fused:
        att_kvr_ref, att_wo_ref, ffn_kr_ref, ffn_wv_ref = refs[:4]
        rest = refs[4:]
    else:
        (att_wk_ref, att_wv_ref, att_wr_ref, att_wo_ref,
         ffn_wk_ref, ffn_wv_ref, ffn_wr_ref) = refs[:7]
        rest = refs[7:]
    out_ref, carry_scr, nd_ref, xaprev_ref, xfprev_ref = rest

    wdt = att_wo_ref.dtype
    t_idx = pl.program_id(1)

    # Reset carried state at the start of each sequence (new batch element).
    @pl.when(t_idx == 0)
    def _():
        nd_ref[...] = jnp.zeros_like(nd_ref)
        xaprev_ref[...] = jnp.zeros_like(xaprev_ref)
        xfprev_ref[...] = jnp.zeros_like(xfprev_ref)

    x = x_ref[...].astype(jnp.float32)

    # Packed (1, H) parameters (rows of the (16, H) operand).
    ln1_w = vec_ref[0:1, :]
    ln1_b = vec_ref[1:2, :]
    ln2_w = vec_ref[2:3, :]
    ln2_b = vec_ref[3:4, :]
    etf = vec_ref[5:6, :]                      # exp(time_first), precomputed
    att_bo = vec_ref[9:10, :]

    # Precomputed decay powers, lane-duplicated to 2H ([num | den] layout).
    p2 = aux_ref[0:C, :]                       # decay^{i}   , (C, 2H)
    ip2 = aux_ref[C:2 * C, :]                  # decay^{-i}  , (C, 2H)
    inv_td2 = aux_ref[2 * C:2 * C + 1, :]      # decay^{-1}  , (1, 2H)
    tdC2 = aux_ref[2 * C + 1:2 * C + 2, :]     # decay^{C}   , (1, 2H)

    def layernorm(z, w, b):
        mu = jnp.mean(z, axis=-1, keepdims=True)
        var = jnp.mean((z - mu) ** 2, axis=-1, keepdims=True)
        return (z - mu) * lax.rsqrt(var + 1e-5) * w + b

    def time_shift(z, prev_row):
        # shifted[t] = z[t-1]; shifted[0] = last row of previous tile (or 0).
        rolled = pltpu.roll(z, shift=1, axis=0)          # XLU sublane rotate
        row0 = lax.broadcasted_iota(jnp.int32, z.shape, 0) == 0
        return jnp.where(row0, prev_row, rolled)

    # ------------------------------ attention ------------------------------
    xa = layernorm(x, ln1_w, ln1_b)
    sa = time_shift(xa, xaprev_ref[...])
    xaprev_ref[...] = xa[Tt - 1:Tt, :]          # carry last row to next tile

    if fused:
        # time-mix folded into the weights; one (Tt,2H)@(2H,3H) MXU matmul.
        lhs = jnp.concatenate([xa, sa], axis=-1).astype(wdt)
        kvr = jnp.dot(lhs, att_kvr_ref[...], preferred_element_type=jnp.float32)
        k = jnp.clip(kvr[:, 0:H], -60.0, 30.0)
        v = kvr[:, H:2 * H]
        r = jax.nn.sigmoid(kvr[:, 2 * H:3 * H])
    else:
        tmk = vec_ref[6:7, :]
        tmv = vec_ref[7:8, :]
        tmr = vec_ref[8:9, :]
        xk = (xa * tmk + sa * (1.0 - tmk)).astype(wdt)
        xv = (xa * tmv + sa * (1.0 - tmv)).astype(wdt)
        xr = (xa * tmr + sa * (1.0 - tmr)).astype(wdt)
        k = jnp.clip(jnp.dot(xk, att_wk_ref[...],
                             preferred_element_type=jnp.float32), -60.0, 30.0)
        v = jnp.dot(xv, att_wv_ref[...], preferred_element_type=jnp.float32)
        r = jax.nn.sigmoid(jnp.dot(xr, att_wr_ref[...],
                                   preferred_element_type=jnp.float32))

    # ---- WKV recurrence: bulk (carry-independent) prefixes + tiny serial carry
    # num_t = sum_{j<t} decay^{t-1-j} exp(k_j) v_j  (same for den without v).
    # Within a C-row chunk: num_{s0+i} = decay^i * (num_chunk
    #                        + decay^{-1} * sum_{j<i} decay^{-j} exp(k_{s0+j}) v).
    e2 = jnp.exp(k)                              # (Tt, H)
    ae = jnp.concatenate([e2 * v, e2], axis=-1)  # (Tt, 2H)  [num | den] streams
    b3 = ae.reshape(n_chunks, C, H2) * ip2[None]
    b = b3.reshape(Tt, H2)

    # Block-diagonal strictly-lower-triangular (Tt, Tt) matrix.
    rr = lax.broadcasted_iota(jnp.int32, (Tt, Tt), 0)
    cc = lax.broadcasted_iota(jnp.int32, (Tt, Tt), 1)
    same_chunk = jnp.right_shift(rr, log2c) == jnp.right_shift(cc, log2c)
    tri = jnp.where((cc < rr) & same_chunk, 1.0, 0.0).astype(jnp.float32)

    pre = jnp.dot(tri, b, preferred_element_type=jnp.float32)   # (Tt, 2H)
    tot = jnp.sum(b3, axis=1)                                   # (n_chunks, 2H)

    # Serial part: only the (1, 2H) carry update per chunk (VPU, unrolled).
    nd = nd_ref[...]
    for c in range(n_chunks):
        carry_scr[c:c + 1, :] = nd               # state entering chunk c
        nd = tdC2 * (nd + inv_td2 * tot[c:c + 1, :])
    nd_ref[...] = nd                             # carry to the next seq tile

    carries = carry_scr[...]                     # (n_chunks, 2H)
    state = p2[None] * (carries[:, None, :]
                        + inv_td2[None] * pre.reshape(n_chunks, C, H2))
    state = state.reshape(Tt, H2)

    ek = e2 * etf                                # exp(time_first + k)
    wkv = (state[:, 0:H] + ek * v) * pl.reciprocal(state[:, H:H2] + ek,
                                                   approx=True)

    att = jnp.dot((r * wkv).astype(wdt), att_wo_ref[...],
                  preferred_element_type=jnp.float32) + att_bo
    x1 = x + att                                 # x = attention + x

    # -------------------------------- ffn ----------------------------------
    xf = layernorm(x1, ln2_w, ln2_b)
    sf = time_shift(xf, xfprev_ref[...])
    xfprev_ref[...] = xf[Tt - 1:Tt, :]

    if fused:
        lhs2 = jnp.concatenate([xf, sf], axis=-1).astype(wdt)
        kr = jnp.dot(lhs2, ffn_kr_ref[...], preferred_element_type=jnp.float32)
        fk = jnp.maximum(kr[:, 0:H], 0.0)
        fr = jax.nn.sigmoid(kr[:, H:2 * H])
    else:
        ftmk = vec_ref[10:11, :]
        ftmr = vec_ref[11:12, :]
        xfk = (xf * ftmk + sf * (1.0 - ftmk)).astype(wdt)
        xfr = (xf * ftmr + sf * (1.0 - ftmr)).astype(wdt)
        fk = jnp.maximum(jnp.dot(xfk, ffn_wk_ref[...],
                                 preferred_element_type=jnp.float32), 0.0)
        fr = jax.nn.sigmoid(jnp.dot(xfr, ffn_wr_ref[...],
                                    preferred_element_type=jnp.float32))
    fv = jnp.dot((fk * fk).astype(wdt), ffn_wv_ref[...],
                 preferred_element_type=jnp.float32)

    # ffn = ffn_out + x1 ; out = ffn + x1  (exactly as in the torch forward)
    out_ref[...] = (fr * fv + x1 + x1).astype(out_ref.dtype)


# ----------------------------------------------------------------------------
# Parameter prep (done ONCE, outside the per-call jit).
# ----------------------------------------------------------------------------
def prepare_rwkv_params(p, weight_dtype=jnp.bfloat16, fuse_projections=None):
    f32 = jnp.float32
    g = lambda name: jnp.asarray(p[name], f32).reshape(-1)
    H = g("ln1_w").shape[0]
    rows = [
        g("ln1_w"), g("ln1_b"), g("ln2_w"), g("ln2_b"),
        g("att_td"), jnp.exp(g("att_tf")),
        g("att_tmk"), g("att_tmv"), g("att_tmr"),
        g("att_bo"), g("ffn_tmk"), g("ffn_tmr"),
    ]
    vecs = jnp.stack(rows, axis=0)
    vecs = jnp.concatenate([vecs, jnp.zeros((4, H), f32)], axis=0)  # pad -> 16

    tw = lambda w: jnp.asarray(w, f32).T        # torch (out,in) -> (in,out)
    if fuse_projections is None:
        fuse_projections = H < 256              # below MXU tile: fuse for free
    out = {"vecs": vecs}
    if fuse_projections:
        tmk = g("att_tmk")[:, None]
        tmv = g("att_tmv")[:, None]
        tmr = g("att_tmr")[:, None]
        wk, wv, wr = tw(p["att_Wk"]), tw(p["att_Wv"]), tw(p["att_Wr"])
        att_kvr = jnp.concatenate([
            jnp.concatenate([tmk * wk, tmv * wv, tmr * wr], axis=1),
            jnp.concatenate([(1 - tmk) * wk, (1 - tmv) * wv, (1 - tmr) * wr],
                            axis=1),
        ], axis=0)                               # (2H, 3H) on [x, shifted]
        ftmk = g("ffn_tmk")[:, None]
        ftmr = g("ffn_tmr")[:, None]
        fwk, fwr = tw(p["ffn_Wk"]), tw(p["ffn_Wr"])
        ffn_kr = jnp.concatenate([
            jnp.concatenate([ftmk * fwk, ftmr * fwr], axis=1),
            jnp.concatenate([(1 - ftmk) * fwk, (1 - ftmr) * fwr], axis=1),
        ], axis=0)                               # (2H, 2H)
        out.update(
            att_kvr=att_kvr.astype(weight_dtype),
            att_wo=tw(p["att_Wo"]).astype(weight_dtype),
            ffn_kr=ffn_kr.astype(weight_dtype),
            ffn_wv=tw(p["ffn_Wv"]).astype(weight_dtype))
    else:
        out.update(
            att_wk=tw(p["att_Wk"]).astype(weight_dtype),
            att_wv=tw(p["att_Wv"]).astype(weight_dtype),
            att_wr=tw(p["att_Wr"]).astype(weight_dtype),
            att_wo=tw(p["att_Wo"]).astype(weight_dtype),
            ffn_wk=tw(p["ffn_Wk"]).astype(weight_dtype),
            ffn_wv=tw(p["ffn_Wv"]).astype(weight_dtype),
            ffn_wr=tw(p["ffn_Wr"]).astype(weight_dtype))
    return out


# ----------------------------------------------------------------------------
# Wrapper
# ----------------------------------------------------------------------------
@functools.partial(jax.jit, static_argnames=("seq_tile",))
def rwkv_block(x, prep, *, seq_tile=None):
    B, T, H = x.shape
    Tt = seq_tile if seq_tile is not None else min(T, 256)
    assert T % Tt == 0, "T must be divisible by seq_tile"
    assert Tt % 8 == 0, "seq_tile must be a multiple of 8"
    NT = T // Tt
    # Keep C <= 16 so decay^{-(C-1)} * exp(clip(k)=30) stays well inside f32.
    C = 16 if Tt % 16 == 0 else 8
    n_chunks = Tt // C

    fused = "att_kvr" in prep
    if fused:
        weights = (prep["att_kvr"], prep["att_wo"], prep["ffn_kr"],
                   prep["ffn_wv"])
    else:
        weights = (prep["att_wk"], prep["att_wv"], prep["att_wr"],
                   prep["att_wo"], prep["ffn_wk"], prep["ffn_wv"],
                   prep["ffn_wr"])
    wdt = weights[0].dtype
    witem = jnp.dtype(wdt).itemsize
    x_item = jnp.dtype(x.dtype).itemsize
    w_bytes = sum(w.shape[0] * w.shape[1] for w in weights) * witem

    # Precomputed decay powers (tiny, computed once per call OUTSIDE the kernel),
    # lane-duplicated to 2H to match the [num | den] concatenated layout.
    td = prep["vecs"][4:5, :]                    # raw time_decay, (1, H)
    ii = jnp.arange(C, dtype=jnp.float32)[:, None]
    aux = jnp.concatenate([
        jnp.exp(-td * ii),                       # decay^{i}
        jnp.exp(td * ii),                        # decay^{-i}
        jnp.exp(td),                             # decay^{-1}
        jnp.exp(-td * float(C)),                 # decay^{C}
    ], axis=0)
    aux = jnp.concatenate([aux, aux], axis=-1)   # (2C+2, 2H)

    # Scoped-VMEM budget from the tile config, capped with headroom below the
    # physical VMEM of the current generation (128 MiB v5e/v6e, 64 MiB v7x).
    tile_b = Tt * H * 4
    need = (2 * w_bytes                          # weights (double-buffered)
            + 2 * 2 * Tt * H * x_item            # x / out tiles, double-buffered
            + 12 * tile_b                        # live f32 intermediates
            + Tt * Tt * 4                        # block-diag tri matrix
            + 2 * ((2 * C + 2) * 2 * H + 16 * H) * 4
            + (1 << 20))                         # headroom
    try:
        phys = int(pltpu.get_tpu_info().vmem_capacity_bytes)
    except Exception:
        phys = 64 << 20
    cap = phys * 7 // 8
    vmem_limit = int(min(max(need * 3 // 2, 32 << 20), cap))

    mm_flops = (24 if fused else 14) * H * H + 4 * Tt * H
    cost = pl.CostEstimate(
        flops=int(B * T * mm_flops),
        transcendentals=int(B * T * H * 6),
        bytes_accessed=int(2 * B * T * H * x_item + w_bytes
                           + (2 * C + 2) * 2 * H * 4 + 16 * H * 4),
    )

    x_spec = pl.BlockSpec((None, Tt, H), lambda b, t: (b, t, 0))
    vec_spec = pl.BlockSpec((16, H), lambda b, t: (0, 0))
    aux_spec = pl.BlockSpec((2 * C + 2, 2 * H), lambda b, t: (0, 0))
    # TODO(synk): mark the constant-index weight/vec/aux specs
    # pipeline_mode=pl.Buffered(1) once verified (halves weight VMEM on v7x).
    w_specs = [pl.BlockSpec(w.shape, lambda b, t: (0, 0)) for w in weights]

    grid_spec = pltpu.PrefetchScalarGridSpec(
        num_scalar_prefetch=0,
        grid=(B, NT),
        in_specs=[x_spec, vec_spec, aux_spec] + w_specs,
        out_specs=pl.BlockSpec((None, Tt, H), lambda b, t: (b, t, 0)),
        scratch_shapes=[
            pltpu.VMEM((n_chunks, 2 * H), jnp.float32),  # per-chunk entry state
            pltpu.VMEM((1, 2 * H), jnp.float32),         # [num|den] tile carry
            pltpu.VMEM((1, H), jnp.float32),             # last ln1 row
            pltpu.VMEM((1, H), jnp.float32),             # last ln2 row
        ],
    )

    def kernel(*refs):
        return _rwkv_block_kernel(*refs, fused=fused, C=C)

    return pl.pallas_call(
        kernel,
        out_shape=jax.ShapeDtypeStruct((B, T, H), x.dtype),
        grid_spec=grid_spec,
        compiler_params=pltpu.CompilerParams(
            # batch axis parallel (megacore / v7x: needs B >= 2 to use both TCs),
            # seq-tile axis carries WKV / time-shift state -> arbitrary.
            dimension_semantics=("parallel", "arbitrary"),
            vmem_limit_bytes=vmem_limit),
        cost_estimate=cost,
    )(x, prep["vecs"], aux, *weights)


# ----------------------------------------------------------------------------
# Pure-JAX reference (mirrors the PyTorch forward exactly)
# ----------------------------------------------------------------------------
def ref_rwkv_block(x, p):
    H = x.shape[-1]

    def layernorm(z, w, b):
        mu = z.mean(-1, keepdims=True)
        var = ((z - mu) ** 2).mean(-1, keepdims=True)
        return (z - mu) / jnp.sqrt(var + 1e-5) * w + b

    def time_shift(z):
        return jnp.concatenate([jnp.zeros_like(z[:, :1]), z[:, :-1]], axis=1)

    def linear(z, W, b=None):
        y = z @ W.T
        return y if b is None else y + b

    # attention
    xa = layernorm(x, p["ln1_w"], p["ln1_b"])
    sa = time_shift(xa)
    k = jnp.clip(linear(xa * p["att_tmk"] + sa * (1 - p["att_tmk"]), p["att_Wk"]),
                 -60.0, 30.0)
    v = linear(xa * p["att_tmv"] + sa * (1 - p["att_tmv"]), p["att_Wv"])
    r = jax.nn.sigmoid(
        linear(xa * p["att_tmr"] + sa * (1 - p["att_tmr"]), p["att_Wr"]))

    B, T, _ = x.shape
    num = jnp.zeros((B, H), jnp.float32)
    den = jnp.zeros((B, H), jnp.float32)
    td = jnp.exp(-p["att_td"])
    tf = p["att_tf"]
    outs = []
    for t in range(T):
        kt, vt = k[:, t], v[:, t]
        e = jnp.exp(tf + kt)
        outs.append((num + e * vt) / (den + e))
        e2 = jnp.exp(kt)
        num = td * num + e2 * vt
        den = td * den + e2
    wkv = jnp.stack(outs, axis=1)
    att = linear(r * wkv, p["att_Wo"], p["att_bo"])
    x1 = x + att

    # ffn
    xf = layernorm(x1, p["ln2_w"], p["ln2_b"])
    sf = time_shift(xf)
    fk = linear(xf * p["ffn_tmk"] + sf * (1 - p["ffn_tmk"]), p["ffn_Wk"])
    fr = jax.nn.sigmoid(
        linear(xf * p["ffn_tmr"] + sf * (1 - p["ffn_tmr"]), p["ffn_Wr"]))
    fv = linear(jnp.maximum(fk, 0.0) ** 2, p["ffn_Wv"])
    return fr * fv + x1 + x1


# ----------------------------------------------------------------------------
# Main
# ----------------------------------------------------------------------------
if __name__ == "__main__":
    H = 32
    keys = jax.random.split(jax.random.PRNGKey(0), 24)

    def lin_w(k):  # torch Linear weight shape (out, in)
        return jax.random.uniform(k, (H, H), jnp.float32, -1.0, 1.0) / jnp.sqrt(H)

    params = dict(
        ln1_w=1.0 + 0.1 * jax.random.normal(keys[0], (H,), jnp.float32),
        ln1_b=0.1 * jax.random.normal(keys[1], (H,), jnp.float32),
        ln2_w=1.0 + 0.1 * jax.random.normal(keys[2], (H,), jnp.float32),
        ln2_b=0.1 * jax.random.normal(keys[3], (H,), jnp.float32),
        att_td=0.5 + jax.random.uniform(keys[4], (H,), jnp.float32),
        att_tf=0.3 * jax.random.normal(keys[5], (H,), jnp.float32),
        att_tmk=jax.random.uniform(keys[6], (H,), jnp.float32),
        att_tmv=jax.random.uniform(keys[7], (H,), jnp.float32),
        att_tmr=jax.random.uniform(keys[8], (H,), jnp.float32),
        att_Wk=lin_w(keys[9]),
        att_Wv=lin_w(keys[10]),
        att_Wr=lin_w(keys[11]),
        att_Wo=lin_w(keys[12]),
        att_bo=0.1 * jax.random.normal(keys[13], (H,), jnp.float32),
        ffn_tmk=jax.random.uniform(keys[14], (H,), jnp.float32),
        ffn_tmr=jax.random.uniform(keys[15], (H,), jnp.float32),
        ffn_Wk=lin_w(keys[16]),
        ffn_Wv=lin_w(keys[17]),
        ffn_Wr=lin_w(keys[18]),
    )

    def check(out, ref, tol, name):
        err = float(jnp.max(jnp.abs(out - ref)))
        assert out.shape == ref.shape
        assert jnp.allclose(out, ref, atol=tol, rtol=tol), \
            f"{name}: max abs err {err}"

    # Primary toy shape (B=2, T=8, H=32); tolerance accounts for the approx
    # EUP reciprocal in the WKV divide (f32) / bf16 weights (bf16 run).
    x8 = jax.random.normal(keys[19], (2, 8, H), jnp.float32)
    ref8 = ref_rwkv_block(x8, params)

    prep_f32 = prepare_rwkv_params(params, weight_dtype=jnp.float32)
    out = jax.block_until_ready(rwkv_block(x8, prep_f32))
    check(out, ref8, 1.5e-2, "f32 fused T=8")

    prep_bf16 = prepare_rwkv_params(params)                  # bf16 MXU default
    out = jax.block_until_ready(rwkv_block(x8, prep_bf16))
    check(out, ref8, 4e-2, "bf16 fused T=8")

    # Longer sequence: exercises C=16 multi-chunk path and the cross-tile carry.
    x32 = jax.random.normal(keys[20], (2, 32, H), jnp.float32)
    ref32 = ref_rwkv_block(x32, params)
    out = jax.block_until_ready(rwkv_block(x32, prep_f32))            # Tt=32
    check(out, ref32, 1.5e-2, "f32 fused T=32")
    out = jax.block_until_ready(rwkv_block(x32, prep_f32, seq_tile=8))  # 4 tiles
    check(out, ref32, 1.5e-2, "f32 fused T=32 tiled")

    prep_nofuse = prepare_rwkv_params(params, weight_dtype=jnp.float32,
                                      fuse_projections=False)
    out = jax.block_until_ready(rwkv_block(x32, prep_nofuse))
    check(out, ref32, 1.5e-2, "f32 unfused T=32")

    print("KERNEL_OK")
</pallas_src>

<mosaic_0001>
module attributes {stable_mosaic.version = 11 : i64} {
  func.func @kernel(%arg0: i32, %arg1: i32, %arg2: memref<1x8x32xf32, #tpu.memory_space<vmem>>, %arg3: memref<16x32xf32, #tpu.memory_space<vmem>>, %arg4: memref<18x64xf32, #tpu.memory_space<vmem>>, %arg5: memref<64x96xf32, #tpu.memory_space<vmem>>, %arg6: memref<32x32xf32, #tpu.memory_space<vmem>>, %arg7: memref<64x64xf32, #tpu.memory_space<vmem>>, %arg8: memref<32x32xf32, #tpu.memory_space<vmem>>, %arg9: memref<1x8x32xf32, #tpu.memory_space<vmem>>, %arg10: memref<1x64xf32, #tpu.memory_space<vmem>>, %arg11: memref<1x64xf32, #tpu.memory_space<vmem>>, %arg12: memref<1x32xf32, #tpu.memory_space<vmem>>, %arg13: memref<1x32xf32, #tpu.memory_space<vmem>>) attributes {dimension_semantics = [#tpu.dimension_semantics<parallel>, #tpu.dimension_semantics<arbitrary>], iteration_bounds = array<i64: 2, 1>, scalar_prefetch = 0 : i64, scratch_operands = 4 : i64, tpu.core_type = #tpu.core_type<tc>, window_params = [{transform_indices = @transform_0, window_bounds = array<i64: 1, 8, 32>}, {pipeline_mode = #tpu.pipeline_mode<synchronous>, transform_indices = @transform_1, window_bounds = array<i64: 16, 32>}, {pipeline_mode = #tpu.pipeline_mode<synchronous>, transform_indices = @transform_2, window_bounds = array<i64: 18, 64>}, {pipeline_mode = #tpu.pipeline_mode<synchronous>, transform_indices = @transform_3, window_bounds = array<i64: 64, 96>}, {pipeline_mode = #tpu.pipeline_mode<synchronous>, transform_indices = @transform_4, window_bounds = array<i64: 32, 32>}, {pipeline_mode = #tpu.pipeline_mode<synchronous>, transform_indices = @transform_5, window_bounds = array<i64: 64, 64>}, {pipeline_mode = #tpu.pipeline_mode<synchronous>, transform_indices = @transform_6, window_bounds = array<i64: 32, 32>}, {transform_indices = @transform_7, window_bounds = array<i64: 1, 8, 32>}]} {
    %c0_i32 = arith.constant 0 : i32
    %0 = arith.cmpi eq, %arg1, %c0_i32 : i32
    %1 = arith.extui %0 : i1 to i32
    %c0_i32_0 = arith.constant 0 : i32
    %2 = arith.cmpi ne, %1, %c0_i32_0 : i32
    scf.if %2 {
      %cst_68 = arith.constant 0.000000e+00 : f32
      %168 = vector.broadcast %cst_68 : f32 to vector<1x64xf32>
      %c0_69 = arith.constant 0 : index
      %c0_70 = arith.constant 0 : index
      %169 = vector.load %arg11[%c0_69, %c0_70] : memref<1x64xf32, #tpu.memory_space<vmem>>, vector<1x64xf32>
      tpu.vector_store %arg11[%c0_69, %c0_70], %168 {strides = array<i32>} : memref<1x64xf32, #tpu.memory_space<vmem>>, vector<1x64xf32>,
      %cst_71 = arith.constant 0.000000e+00 : f32
      %170 = vector.broadcast %cst_71 : f32 to vector<1x32xf32>
      %c0_72 = arith.constant 0 : index
      %c0_73 = arith.constant 0 : index
      %171 = vector.load %arg12[%c0_72, %c0_73] : memref<1x32xf32, #tpu.memory_space<vmem>>, vector<1x32xf32>
      tpu.vector_store %arg12[%c0_72, %c0_73], %170 {strides = array<i32>} : memref<1x32xf32, #tpu.memory_space<vmem>>, vector<1x32xf32>,
      %cst_74 = arith.constant 0.000000e+00 : f32
      %172 = vector.broadcast %cst_74 : f32 to vector<1x32xf32>
      %c0_75 = arith.constant 0 : index
      %c0_76 = arith.constant 0 : index
      %173 = vector.load %arg13[%c0_75, %c0_76] : memref<1x32xf32, #tpu.memory_space<vmem>>, vector<1x32xf32>
      tpu.vector_store %arg13[%c0_75, %c0_76], %172 {strides = array<i32>} : memref<1x32xf32, #tpu.memory_space<vmem>>, vector<1x32xf32>,
    } else {
    }
    %c0 = arith.constant 0 : index
    %c0_1 = arith.constant 0 : index
    %c0_2 = arith.constant 0 : index
    %3 = vector.load %arg2[%c0, %c0_1, %c0_2] : memref<1x8x32xf32, #tpu.memory_space<vmem>>, vector<1x8x32xf32>
    %4 = vector.shape_cast %3 : vector<1x8x32xf32> to vector<8x32xf32>
    %c0_3 = arith.constant 0 : index
    %c0_4 = arith.constant 0 : index
    %5 = vector.load %arg3[%c0_3, %c0_4] : memref<16x32xf32, #tpu.memory_space<vmem>>, vector<1x32xf32>
    %c1 = arith.constant 1 : index
    %c0_5 = arith.constant 0 : index
    %6 = vector.load %arg3[%c1, %c0_5] : memref<16x32xf32, #tpu.memory_space<vmem>>, vector<1x32xf32>
    %c2 = arith.constant 2 : index
    %c0_6 = arith.constant 0 : index
    %7 = vector.load %arg3[%c2, %c0_6] : memref<16x32xf32, #tpu.memory_space<vmem>>, vector<1x32xf32>
    %c3 = arith.constant 3 : index
    %c0_7 = arith.constant 0 : index
    %8 = vector.load %arg3[%c3, %c0_7] : memref<16x32xf32, #tpu.memory_space<vmem>>, vector<1x32xf32>
    %c5 = arith.constant 5 : index
    %c0_8 = arith.constant 0 : index
    %9 = vector.load %arg3[%c5, %c0_8] : memref<16x32xf32, #tpu.memory_space<vmem>>, vector<1x32xf32>
    %c9 = arith.constant 9 : index
    %c0_9 = arith.constant 0 : index
    %10 = vector.load %arg3[%c9, %c0_9] : memref<16x32xf32, #tpu.memory_space<vmem>>, vector<1x32xf32>
    %c0_10 = arith.constant 0 : index
    %c0_11 = arith.constant 0 : index
    %11 = vector.load %arg4[%c0_10, %c0_11] : memref<18x64xf32, #tpu.memory_space<vmem>>, vector<8x64xf32>
    %c8 = arith.constant 8 : index
    %c0_12 = arith.constant 0 : index
    %12 = vector.load %arg4[%c8, %c0_12] : memref<18x64xf32, #tpu.memory_space<vmem>>, vector<8x64xf32>
    %c16 = arith.constant 16 : index
    %c0_13 = arith.constant 0 : index
    %13 = vector.load %arg4[%c16, %c0_13] : memref<18x64xf32, #tpu.memory_space<vmem>>, vector<1x64xf32>
    %c17 = arith.constant 17 : index
    %c0_14 = arith.constant 0 : index
    %14 = vector.load %arg4[%c17, %c0_14] : memref<18x64xf32, #tpu.memory_space<vmem>>, vector<1x64xf32>
    %cst = arith.constant dense<0.000000e+00> : vector<8xf32>
    %15 = vector.multi_reduction <add>, %4, %cst [1] : vector<8x32xf32> to vector<8xf32>
    %16 = vector.shape_cast %15 : vector<8xf32> to vector<8x1xf32>
    %cst_15 = arith.constant 3.200000e+01 : f32
    %17 = vector.broadcast %cst_15 : f32 to vector<8x1xf32>
    %18 = arith.divf %16, %17 : vector<8x1xf32>
    %19 = vector.broadcast %18 : vector<8x1xf32> to vector<8x32xf32>
    %20 = arith.subf %4, %19 : vector<8x32xf32>
    %21 = arith.mulf %20, %20 : vector<8x32xf32>
    %cst_16 = arith.constant dense<0.000000e+00> : vector<8xf32>
    %22 = vector.multi_reduction <add>, %21, %cst_16 [1] : vector<8x32xf32> to vector<8xf32>
    %23 = vector.shape_cast %22 : vector<8xf32> to vector<8x1xf32>
    %cst_17 = arith.constant 3.200000e+01 : f32
    %24 = vector.broadcast %cst_17 : f32 to vector<8x1xf32>
    %25 = arith.divf %23, %24 : vector<8x1xf32>
    %26 = vector.broadcast %18 : vector<8x1xf32> to vector<8x32xf32>
    %27 = arith.subf %4, %26 : vector<8x32xf32>
    %cst_18 = arith.constant 9.99999974E-6 : f32
    %28 = vector.broadcast %cst_18 : f32 to vector<8x1xf32>
    %29 = arith.addf %25, %28 : vector<8x1xf32>
    %30 = math.rsqrt %29 : vector<8x1xf32>
    %31 = vector.broadcast %30 : vector<8x1xf32> to vector<8x32xf32>
    %32 = arith.mulf %27, %31 : vector<8x32xf32>
    %33 = vector.broadcast %5 : vector<1x32xf32> to vector<8x32xf32>
    %34 = arith.mulf %32, %33 : vector<8x32xf32>
    %35 = vector.broadcast %6 : vector<1x32xf32> to vector<8x32xf32>
    %36 = arith.addf %34, %35 : vector<8x32xf32>
    %c0_19 = arith.constant 0 : index
    %c0_20 = arith.constant 0 : index
    %37 = vector.load %arg12[%c0_19, %c0_20] : memref<1x32xf32, #tpu.memory_space<vmem>>, vector<1x32xf32>
    %c1_i32 = arith.constant 1 : i32
    %38 = tpu.dynamic_rotate %36 by %c1_i32 dim 0 : vector<8x32xf32>, i32 -> vector<8x32xf32>
    %39 = tpu.iota {dimensions = array<i32: 0>} : vector<8x32xi32>
    %c0_i32_21 = arith.constant 0 : i32
    %40 = vector.broadcast %c0_i32_21 : i32 to vector<8x32xi32>
    %41 = arith.cmpi eq, %39, %40 : vector<8x32xi32>
    %42 = vector.shape_cast %37 : vector<1x32xf32> to vector<1x32xf32>
    %43 = vector.broadcast %42 : vector<1x32xf32> to vector<8x32xf32>
    %44 = arith.select %41, %43, %38 : vector<8x32xi1>, vector<8x32xf32>
    %45 = vector.extract_strided_slice %36 {offsets = [7, 0], sizes = [1, 32], strides = [1, 1]} : vector<8x32xf32> to vector<1x32xf32>
    %c0_22 = arith.constant 0 : index
    %c0_23 = arith.constant 0 : index
    %46 = vector.load %arg12[%c0_22, %c0_23] : memref<1x32xf32, #tpu.memory_space<vmem>>, vector<1x32xf32>
    tpu.vector_store %arg12[%c0_22, %c0_23], %45 {strides = array<i32>} : memref<1x32xf32, #tpu.memory_space<vmem>>, vector<1x32xf32>,
    %47 = tpu.concatenate %36, %44 in 1 : vector<8x32xf32>, vector<8x32xf32> -> vector<8x64xf32>
    %c0_24 = arith.constant 0 : index
    %c0_25 = arith.constant 0 : index
    %48 = vector.load %arg5[%c0_24, %c0_25] : memref<64x96xf32, #tpu.memory_space<vmem>>, vector<64x96xf32>
    %cst_26 = arith.constant dense<0.000000e+00> : vector<8x96xf32>
    %49 = tpu.matmul %47, %48, %cst_26 {dimension_numbers = #tpu.dot_dimension_numbers<[1], [0], [0], [1], [0, 0, 1, 1], [], []>} : vector<8x64xf32>, vector<64x96xf32>, vector<8x96xf32> -> vector<8x96xf32>
    %50 = vector.extract_strided_slice %49 {offsets = [0, 0], sizes = [8, 32], strides = [1, 1]} : vector<8x96xf32> to vector<8x32xf32>
    %cst_27 = arith.constant -6.000000e+01 : f32
    %cst_28 = arith.constant 3.000000e+01 : f32
    %51 = vector.broadcast %cst_27 : f32 to vector<8x32xf32>
    %52 = arith.maximumf %51, %50 : vector<8x32xf32>
    %53 = vector.broadcast %cst_28 : f32 to vector<8x32xf32>
    %54 = arith.minimumf %53, %52 : vector<8x32xf32>
    %55 = vector.extract_strided_slice %49 {offsets = [0, 32], sizes = [8, 32], strides = [1, 1]} : vector<8x96xf32> to vector<8x32xf32>
    %56 = vector.extract_strided_slice %49 {offsets = [0, 64], sizes = [8, 32], strides = [1, 1]} : vector<8x96xf32> to vector<8x32xf32>
    %57 = arith.negf %56 : vector<8x32xf32>
    %58 = math.exp %57 : vector<8x32xf32>
    %cst_29 = arith.constant 1.000000e+00 : f32
    %59 = vector.broadcast %cst_29 : f32 to vector<8x32xf32>
    %60 = arith.addf %59, %58 : vector<8x32xf32>
    %61 = arith.divf %59, %60 : vector<8x32xf32>
    %62 = math.exp %54 : vector<8x32xf32>
    %63 = arith.mulf %62, %55 : vector<8x32xf32>
    %64 = tpu.concatenate %63, %62 in 1 : vector<8x32xf32>, vector<8x32xf32> -> vector<8x64xf32>
    %65 = vector.shape_cast %64 : vector<8x64xf32> to vector<1x8x64xf32>
    %66 = vector.shape_cast %12 : vector<8x64xf32> to vector<1x8x64xf32>
    %67 = arith.mulf %65, %66 : vector<1x8x64xf32>
    %68 = vector.shape_cast %67 : vector<1x8x64xf32> to vector<8x64xf32>
    %69 = tpu.iota {dimensions = array<i32: 0>} : vector<8x8xi32>
    %70 = tpu.iota {dimensions = array<i32: 1>} : vector<8x8xi32>
    %c3_i32 = arith.constant 3 : i32
    %71 = vector.broadcast %c3_i32 : i32 to vector<8x8xi32>
    %72 = arith.shrsi %69, %71 : vector<8x8xi32>
    %c3_i32_30 = arith.constant 3 : i32
    %73 = vector.broadcast %c3_i32_30 : i32 to vector<8x8xi32>
    %74 = arith.shrsi %70, %73 : vector<8x8xi32>
    %75 = arith.cmpi eq, %72, %74 : vector<8x8xi32>
    %76 = arith.cmpi slt, %70, %69 : vector<8x8xi32>
    %77 = arith.andi %76, %75 : vector<8x8xi1>
    %cst_31 = arith.constant 1.000000e+00 : f32
    %cst_32 = arith.constant 0.000000e+00 : f32
    %78 = vector.broadcast %cst_31 : f32 to vector<8x8xf32>
    %79 = vector.broadcast %cst_32 : f32 to vector<8x8xf32>
    %80 = arith.select %77, %78, %79 : vector<8x8xi1>, vector<8x8xf32>
    %cst_33 = arith.constant dense<0.000000e+00> : vector<8x64xf32>
    %81 = tpu.matmul %80, %68, %cst_33 {dimension_numbers = #tpu.dot_dimension_numbers<[1], [0], [0], [1], [0, 0, 1, 1], [], []>} : vector<8x8xf32>, vector<8x64xf32>, vector<8x64xf32> -> vector<8x64xf32>
    %cst_34 = arith.constant dense<0.000000e+00> : vector<1x64xf32>
    %82 = vector.multi_reduction <add>, %67, %cst_34 [1] : vector<1x8x64xf32> to vector<1x64xf32>
    %c0_35 = arith.constant 0 : index
    %c0_36 = arith.constant 0 : index
    %83 = vector.load %arg11[%c0_35, %c0_36] : memref<1x64xf32, #tpu.memory_space<vmem>>, vector<1x64xf32>
    %c0_37 = arith.constant 0 : index
    %c0_38 = arith.constant 0 : index
    %84 = vector.load %arg10[%c0_37, %c0_38] : memref<1x64xf32, #tpu.memory_space<vmem>>, vector<1x64xf32>
    tpu.vector_store %arg10[%c0_37, %c0_38], %83 {strides = array<i32>} : memref<1x64xf32, #tpu.memory_space<vmem>>, vector<1x64xf32>,
    %85 = arith.mulf %13, %82 : vector<1x64xf32>
    %86 = arith.addf %83, %85 : vector<1x64xf32>
    %87 = arith.mulf %14, %86 : vector<1x64xf32>
    %c0_39 = arith.constant 0 : index
    %c0_40 = arith.constant 0 : index
    %88 = vector.load %arg11[%c0_39, %c0_40] : memref<1x64xf32, #tpu.memory_space<vmem>>, vector<1x64xf32>
    tpu.vector_store %arg11[%c0_39, %c0_40], %87 {strides = array<i32>} : memref<1x64xf32, #tpu.memory_space<vmem>>, vector<1x64xf32>,
    %c0_41 = arith.constant 0 : index
    %c0_42 = arith.constant 0 : index
    %89 = vector.load %arg10[%c0_41, %c0_42] : memref<1x64xf32, #tpu.memory_space<vmem>>, vector<1x64xf32>
    %90 = vector.shape_cast %11 : vector<8x64xf32> to vector<1x8x64xf32>
    %91 = vector.shape_cast %89 : vector<1x64xf32> to vector<1x1x64xf32>
    %92 = vector.shape_cast %13 : vector<1x64xf32> to vector<1x1x64xf32>
    %93 = vector.shape_cast %81 : vector<8x64xf32> to vector<1x8x64xf32>
    %94 = vector.broadcast %92 : vector<1x1x64xf32> to vector<1x8x64xf32>
    %95 = arith.mulf %94, %93 : vector<1x8x64xf32>
    %96 = vector.broadcast %91 : vector<1x1x64xf32> to vector<1x8x64xf32>
    %97 = arith.addf %96, %95 : vector<1x8x64xf32>
    %98 = arith.mulf %90, %97 : vector<1x8x64xf32>
    %99 = vector.shape_cast %98 : vector<1x8x64xf32> to vector<8x64xf32>
    %100 = vector.broadcast %9 : vector<1x32xf32> to vector<8x32xf32>
    %101 = arith.mulf %62, %100 : vector<8x32xf32>
    %102 = vector.extract_strided_slice %99 {offsets = [0, 0], sizes = [8, 32], strides = [1, 1]} : vector<8x64xf32> to vector<8x32xf32>
    %103 = arith.mulf %101, %55 : vector<8x32xf32>
    %104 = arith.addf %102, %103 : vector<8x32xf32>
    %105 = vector.extract_strided_slice %99 {offsets = [0, 32], sizes = [8, 32], strides = [1, 1]} : vector<8x64xf32> to vector<8x32xf32>
    %106 = arith.addf %105, %101 : vector<8x32xf32>
    %107 = tpu.reciprocal %106 {approx = true} : vector<8x32xf32> -> vector<8x32xf32>
    %108 = arith.mulf %104, %107 : vector<8x32xf32>
    %109 = arith.mulf %61, %108 : vector<8x32xf32>
    %c0_43 = arith.constant 0 : index
    %c0_44 = arith.constant 0 : index
    %110 = vector.load %arg6[%c0_43, %c0_44] : memref<32x32xf32, #tpu.memory_space<vmem>>, vector<32x32xf32>
    %cst_45 = arith.constant dense<0.000000e+00> : vector<8x32xf32>
    %111 = tpu.matmul %109, %110, %cst_45 {dimension_numbers = #tpu.dot_dimension_numbers<[1], [0], [0], [1], [0, 0, 1, 1], [], []>} : vector<8x32xf32>, vector<32x32xf32>, vector<8x32xf32> -> vector<8x32xf32>
    %112 = vector.broadcast %10 : vector<1x32xf32> to vector<8x32xf32>
    %113 = arith.addf %111, %112 : vector<8x32xf32>
    %114 = arith.addf %4, %113 : vector<8x32xf32>
    %cst_46 = arith.constant dense<0.000000e+00> : vector<8xf32>
    %115 = vector.multi_reduction <add>, %114, %cst_46 [1] : vector<8x32xf32> to vector<8xf32>
    %116 = vector.shape_cast %115 : vector<8xf32> to vector<8x1xf32>
    %cst_47 = arith.constant 3.200000e+01 : f32
    %117 = vector.broadcast %cst_47 : f32 to vector<8x1xf32>
    %118 = arith.divf %116, %117 : vector<8x1xf32>
    %119 = vector.broadcast %118 : vector<8x1xf32> to vector<8x32xf32>
    %120 = arith.subf %114, %119 : vector<8x32xf32>
    %121 = arith.mulf %120, %120 : vector<8x32xf32>
    %cst_48 = arith.constant dense<0.000000e+00> : vector<8xf32>
    %122 = vector.multi_reduction <add>, %121, %cst_48 [1] : vector<8x32xf32> to vector<8xf32>
    %123 = vector.shape_cast %122 : vector<8xf32> to vector<8x1xf32>
    %cst_49 = arith.constant 3.200000e+01 : f32
    %124 = vector.broadcast %cst_49 : f32 to vector<8x1xf32>
    %125 = arith.divf %123, %124 : vector<8x1xf32>
    %126 = vector.broadcast %118 : vector<8x1xf32> to vector<8x32xf32>
    %127 = arith.subf %114, %126 : vector<8x32xf32>
    %cst_50 = arith.constant 9.99999974E-6 : f32
    %128 = vector.broadcast %cst_50 : f32 to vector<8x1xf32>
    %129 = arith.addf %125, %128 : vector<8x1xf32>
    %130 = math.rsqrt %129 : vector<8x1xf32>
    %131 = vector.broadcast %130 : vector<8x1xf32> to vector<8x32xf32>
    %132 = arith.mulf %127, %131 : vector<8x32xf32>
    %133 = vector.broadcast %7 : vector<1x32xf32> to vector<8x32xf32>
    %134 = arith.mulf %132, %133 : vector<8x32xf32>
    %135 = vector.broadcast %8 : vector<1x32xf32> to vector<8x32xf32>
    %136 = arith.addf %134, %135 : vector<8x32xf32>
    %c0_51 = arith.constant 0 : index
    %c0_52 = arith.constant 0 : index
    %137 = vector.load %arg13[%c0_51, %c0_52] : memref<1x32xf32, #tpu.memory_space<vmem>>, vector<1x32xf32>
    %c1_i32_53 = arith.constant 1 : i32
    %138 = tpu.dynamic_rotate %136 by %c1_i32_53 dim 0 : vector<8x32xf32>, i32 -> vector<8x32xf32>
    %139 = tpu.iota {dimensions = array<i32: 0>} : vector<8x32xi32>
    %c0_i32_54 = arith.constant 0 : i32
    %140 = vector.broadcast %c0_i32_54 : i32 to vector<8x32xi32>
    %141 = arith.cmpi eq, %139, %140 : vector<8x32xi32>
    %142 = vector.shape_cast %137 : vector<1x32xf32> to vector<1x32xf32>
    %143 = vector.broadcast %142 : vector<1x32xf32> to vector<8x32xf32>
    %144 = arith.select %141, %143, %138 : vector<8x32xi1>, vector<8x32xf32>
    %145 = vector.extract_strided_slice %136 {offsets = [7, 0], sizes = [1, 32], strides = [1, 1]} : vector<8x32xf32> to vector<1x32xf32>
    %c0_55 = arith.constant 0 : index
    %c0_56 = arith.constant 0 : index
    %146 = vector.load %arg13[%c0_55, %c0_56] : memref<1x32xf32, #tpu.memory_space<vmem>>, vector<1x32xf32>
    tpu.vector_store %arg13[%c0_55, %c0_56], %145 {strides = array<i32>} : memref<1x32xf32, #tpu.memory_space<vmem>>, vector<1x32xf32>,
    %147 = tpu.concatenate %136, %144 in 1 : vector<8x32xf32>, vector<8x32xf32> -> vector<8x64xf32>
    %c0_57 = arith.constant 0 : index
    %c0_58 = arith.constant 0 : index
    %148 = vector.load %arg7[%c0_57, %c0_58] : memref<64x64xf32, #tpu.memory_space<vmem>>, vector<64x64xf32>
    %cst_59 = arith.constant dense<0.000000e+00> : vector<8x64xf32>
    %149 = tpu.matmul %147, %148, %cst_59 {dimension_numbers = #tpu.dot_dimension_numbers<[1], [0], [0], [1], [0, 0, 1, 1], [], []>} : vector<8x64xf32>, vector<64x64xf32>, vector<8x64xf32> -> vector<8x64xf32>
    %150 = vector.extract_strided_slice %149 {offsets = [0, 0], sizes = [8, 32], strides = [1, 1]} : vector<8x64xf32> to vector<8x32xf32>
    %cst_60 = arith.constant 0.000000e+00 : f32
    %151 = vector.broadcast %cst_60 : f32 to vector<8x32xf32>
    %152 = arith.maximumf %150, %151 : vector<8x32xf32>
    %153 = vector.extract_strided_slice %149 {offsets = [0, 32], sizes = [8, 32], strides = [1, 1]} : vector<8x64xf32> to vector<8x32xf32>
    %154 = arith.negf %153 : vector<8x32xf32>
    %155 = math.exp %154 : vector<8x32xf32>
    %cst_61 = arith.constant 1.000000e+00 : f32
    %156 = vector.broadcast %cst_61 : f32 to vector<8x32xf32>
    %157 = arith.addf %156, %155 : vector<8x32xf32>
    %158 = arith.divf %156, %157 : vector<8x32xf32>
    %159 = arith.mulf %152, %152 : vector<8x32xf32>
    %c0_62 = arith.constant 0 : index
    %c0_63 = arith.constant 0 : index
    %160 = vector.load %arg8[%c0_62, %c0_63] : memref<32x32xf32, #tpu.memory_space<vmem>>, vector<32x32xf32>
    %cst_64 = arith.constant dense<0.000000e+00> : vector<8x32xf32>
    %161 = tpu.matmul %159, %160, %cst_64 {dimension_numbers = #tpu.dot_dimension_numbers<[1], [0], [0], [1], [0, 0, 1, 1], [], []>} : vector<8x32xf32>, vector<32x32xf32>, vector<8x32xf32> -> vector<8x32xf32>
    %162 = arith.mulf %158, %161 : vector<8x32xf32>
    %163 = arith.addf %162, %114 : vector<8x32xf32>
    %164 = arith.addf %163, %114 : vector<8x32xf32>
    %c0_65 = arith.constant 0 : index
    %c0_66 = arith.constant 0 : index
    %c0_67 = arith.constant 0 : index
    %165 = vector.load %arg9[%c0_65, %c0_66, %c0_67] : memref<1x8x32xf32, #tpu.memory_space<vmem>>, vector<1x8x32xf32>
    %166 = vector.shape_cast %165 : vector<1x8x32xf32> to vector<8x32xf32>
    %167 = vector.shape_cast %164 : vector<8x32xf32> to vector<1x8x32xf32>
    tpu.vector_store %arg9[%c0_65, %c0_66, %c0_67], %167 {strides = array<i32>} : memref<1x8x32xf32, #tpu.memory_space<vmem>>, vector<1x8x32xf32>,
    return
  }
  func.func @transform_0(%arg0: i32, %arg1: i32) -> (i32, i32, i32) {
    %c0_i32 = arith.constant 0 : i32
    %c0_i32_0 = arith.constant 0 : i32
    return %arg0, %arg1, %c0_i32 : i32, i32, i32
  }
  func.func @transform_1(%arg0: i32, %arg1: i32) -> (i32, i32) {
    %c0_i32 = arith.constant 0 : i32
    %c0_i32_0 = arith.constant 0 : i32
    %c0_i32_1 = arith.constant 0 : i32
    return %c0_i32, %c0_i32_0 : i32, i32
  }
  func.func @transform_2(%arg0: i32, %arg1: i32) -> (i32, i32) {
    %c0_i32 = arith.constant 0 : i32
    %c0_i32_0 = arith.constant 0 : i32
    %c0_i32_1 = arith.constant 0 : i32
    return %c0_i32, %c0_i32_0 : i32, i32
  }
  func.func @transform_3(%arg0: i32, %arg1: i32) -> (i32, i32) {
    %c0_i32 = arith.constant 0 : i32
    %c0_i32_0 = arith.constant 0 : i32
    %c0_i32_1 = arith.constant 0 : i32
    return %c0_i32, %c0_i32_0 : i32, i32
  }
  func.func @transform_4(%arg0: i32, %arg1: i32) -> (i32, i32) {
    %c0_i32 = arith.constant 0 : i32
    %c0_i32_0 = arith.constant 0 : i32
    %c0_i32_1 = arith.constant 0 : i32
    return %c0_i32, %c0_i32_0 : i32, i32
  }
  func.func @transform_5(%arg0: i32, %arg1: i32) -> (i32, i32) {
    %c0_i32 = arith.constant 0 : i32
    %c0_i32_0 = arith.constant 0 : i32
    %c0_i32_1 = arith.constant 0 : i32
    return %c0_i32, %c0_i32_0 : i32, i32
  }
  func.func @transform_6(%arg0: i32, %arg1: i32) -> (i32, i32) {
    %c0_i32 = arith.constant 0 : i32
    %c0_i32_0 = arith.constant 0 : i32
    %c0_i32_1 = arith.constant 0 : i32
    return %c0_i32, %c0_i32_0 : i32, i32
  }
  func.func @transform_7(%arg0: i32, %arg1: i32) -> (i32, i32, i32) {
    %c0_i32 = arith.constant 0 : i32
    %c0_i32_0 = arith.constant 0 : i32
    return %arg0, %arg1, %c0_i32 : i32, i32, i32
  }
}

</mosaic_0001>

<llo_original>
// kernel: rwkv_block.1
$region0: #{rwkv_block.1}
  #allocation0 [shape = 'u32[]', space=smem, size = 0x4, offset = 0x4, fixed_abs, tag = 'smem constant byte address 0x4 - core index']
  #allocation1 [shape = 'u32[144,128]{1,0:T(1,128)}', space=vmem, size = 0x12000, scoped, tag = 'internal scratch']
  #allocation2 [shape = 'f32[1,64]{1,0:T(1,128)}', space=vmem, size = 0x200, scoped, tag = 'scratch operand']
  #allocation3 [shape = 'f32[1,64]{1,0:T(1,128)}', space=vmem, size = 0x200, scoped, tag = 'scratch operand']
  #allocation4 [shape = 'f32[1,32]{1,0:T(1,128)}', space=vmem, size = 0x200, scoped, tag = 'scratch operand']
  #allocation5 [shape = 'f32[1,32]{1,0:T(1,128)}', space=vmem, size = 0x200, scoped, tag = 'scratch operand']
  %s0 = inlined_call_operand.hbm [shape: f32[2,8,32], index: 0, kind: input, shape index: {}]
  %s1 = inlined_call_operand.hbm [shape: f32[16,32], index: 1, kind: input, shape index: {}]
  %s2 = inlined_call_operand.vmem [shape: f32[18,64], index: 2, kind: input, shape index: {}]
  %s3 = inlined_call_operand.vmem [shape: f32[64,96], index: 3, kind: input, shape index: {}]
  %s4 = inlined_call_operand.hbm [shape: f32[32,32], index: 4, kind: input, shape index: {}]
  %s5 = inlined_call_operand.hbm [shape: f32[64,64], index: 5, kind: input, shape index: {}]
  %s6 = inlined_call_operand.vmem [shape: f32[32,32], index: 6, kind: input, shape index: {}]
  %s7 = inlined_call_operand.hbm [shape: f32[2,8,32], index: 7, kind: output, shape index: {}]
  %s8 = sld [smem:[#allocation0]]
  $region81: #{rwkv_block.1} parent=0
    _
  %s10 = ssub.s32 1, %s8
  %s11 = scalar_select 0, %s10, %s8
  $region1: #{rwkv_block.1} parent=0
    #allocation6 [shape = 'u8[8192]{0}', space=vmem, size = 0x2000, scoped, tag = 'input window, operand 0']
    #allocation7 [shape = 's32[2]{0}', space=sflag, size = 0x8, scoped, tag = 'scoped memory for rwkv_block.1']
    #allocation8 [shape = 's32[2]{0}', space=sflag, size = 0x8, scoped, tag = 'scoped memory for rwkv_block.1']
    #allocation9 [shape = 'u8[8192]{0}', space=vmem, size = 0x2000, scoped, tag = 'input window, operand 1, single buffered']
    #allocation10 [shape = 's32[1]{0}', space=sflag, size = 0x4, scoped, tag = 'scoped memory for rwkv_block.1']
    #allocation11 [shape = 'u8[16384]{0}', space=vmem, size = 0x4000, scoped, tag = 'input window, operand 4, single buffered']
    #allocation12 [shape = 'u8[32768]{0}', space=vmem, size = 0x8000, scoped, tag = 'input window, operand 5, single buffered']
    #allocation13 [shape = 's32[1]{0}', space=sflag, size = 0x4, scoped, tag = 'scoped memory for rwkv_block.1']
    #allocation14 [shape = 'u8[8192]{0}', space=vmem, size = 0x2000, scoped, tag = 'output window, operand 0']
    %12 = vsyncpa [#allocation7], 0
    %s13 = scalar_lea.sflag [#allocation7], 1
    %14 = vsyncpa %s13, 0
    %15 = vsyncpa [#allocation10], 0
    %16 = vsyncpa [#allocation13], 0
    %17 = vsyncpa [#allocation8], 0
    %s18 = scalar_lea.sflag [#allocation8], 1
    %19 = vsyncpa %s18, 0
    loop: start=0, step=1, limit=4
    $region2: #{rwkv_block.1} parent=1 // loop_pre_header
      _
    $region3: #{rwkv_block.1} parent=1 // loop_header
      %s21 = sphi 0, %s25
      %p22 = scmp.ge.s32.totalorder %s21, 4
      %s28 = sphi 0, %s40
      %s29 = sphi 0, %s36
      %s30 = sphi 0, %s28
      %s31 = sphi 0, %s29
      %s32 = sphi 0, %s30
      %s33 = sphi 0, %s31
      %s45 = sphi 0, %s47
      %s48 = sphi 0, %s45
      %s49 = sphi 0, %s48
      %s65 = sphi 0, %s49
      %s69 = sphi 0, %s69
      %s71 = sphi 0, %s69
      %s72 = sphi 0, %s71
      %s86 = sphi 0, %s72
      %s90 = sphi 0, %s90
      %s92 = sphi 0, %s90
      %s93 = sphi 0, %s92
      %s107 = sphi 0, %s93
      %s111 = sphi 0, %s111
      %s113 = sphi 0, %s111
      %s114 = sphi 0, %s113
      %s128 = sphi 0, %s114
      %s132 = sphi 0, %s132
      %s134 = sphi 0, %s132
      %s135 = sphi 0, %s134
      %s149 = sphi 0, %s135
      %s153 = sphi 0, %s153
      %s155 = sphi 0, %s153
      %s156 = sphi 0, %s155
      %s170 = sphi 0, %s156
      %s174 = sphi 0, %s174
      %s176 = sphi 0, %s174
      %s177 = sphi 0, %s176
      %s191 = sphi 0, %s177
      %s199 = sphi 0, %s201
      %s202 = sphi 0, %s199
      %s203 = sphi 0, %s202
      %s219 = sphi 0, %s203
    $region4: #{rwkv_block.1} parent=1 // loop_header_branch
      %24 = sbr.rel (%p22) target = $region8
    $region5: #{rwkv_block.1} parent=1 // loop_body
      %s26 = ssub.s32 %s21, 1
      %s27 = ssub.s32 %s21, 2
      %s34 = sadd.s32 1, %s29
      %p35 = scmp.ge.s32.totalorder %s34, 1
      %s36 = scalar_select %p35, 0, %s34
      %s37 = sadd.s32 1, %s28
      %s38 = scalar_select %p35, %s37, %s28
      %p39 = scmp.ge.s32.totalorder %s38, 2
      %s40 = scalar_select %p39, 0, %s38
      %s41 = ssub.s32 %s28, %s40
      %s42 = ssub.s32 %s29, %s36
      %s43 = sor.u32 %s41, %s42
      %p44 = scmp.eq.s32.totalorder %s43, 0
      %s46 = sadd.s32 %s45, 1
      %s47 = scalar_select %p44, %s45, %s46
      %p50 = pneg %p44
      %p51 = scmp.eq.s32.totalorder %s21, 1
      %p52 = por %p50, %p51
      %p53 = scmp.ne.s32.totalorder %s45, %s48
      %p54 = scmp.eq.s32.totalorder %s21, 0
      %p55 = por %p53, %p54
      %p56 = scmp.ne.s32.totalorder %s45, %s48
      %p57 = scmp.eq.s32.totalorder %s26, 1
      %p58 = por %p56, %p57
      %p59 = scmp.ne.s32.totalorder %s48, %s49
      %p60 = scmp.eq.s32.totalorder %s26, 0
      %p61 = por %p59, %p60
      %p62 = scmp.ne.s32.totalorder %s48, %s49
      %p63 = scmp.eq.s32.totalorder %s27, 1
      %p64 = por %p62, %p63
      %p66 = scmp.ne.s32.totalorder %s49, %s65
      %p67 = scmp.eq.s32.totalorder %s27, 0
      %p68 = por %p66, %p67
      %s70 = sadd.s32 %s69, 1
      %p73 = scmp.eq.s32.totalorder %s21, 1
      %p74 = scmp.ne.s32.totalorder %s69, %s71
      %p75 = scmp.eq.s32.totalorder %s21, 0
      %p76 = por %p74, %p75
      %p77 = scmp.ne.s32.totalorder %s69, %s71
      %p78 = scmp.eq.s32.totalorder %s26, 1
      %p79 = por %p77, %p78
      %p80 = scmp.ne.s32.totalorder %s71, %s72
      %p81 = scmp.eq.s32.totalorder %s26, 0
      %p82 = por %p80, %p81
      %p83 = scmp.ne.s32.totalorder %s71, %s72
      %p84 = scmp.eq.s32.totalorder %s27, 1
      %p85 = por %p83, %p84
      %p87 = scmp.ne.s32.totalorder %s72, %s86
      %p88 = scmp.eq.s32.totalorder %s27, 0
      %p89 = por %p87, %p88
      %s91 = sadd.s32 %s90, 1
      %p94 = scmp.eq.s32.totalorder %s21, 1
      %p95 = scmp.ne.s32.totalorder %s90, %s92
      %p96 = scmp.eq.s32.totalorder %s21, 0
      %p97 = por %p95, %p96
      %p98 = scmp.ne.s32.totalorder %s90, %s92
      %p99 = scmp.eq.s32.totalorder %s26, 1
      %p100 = por %p98, %p99
      %p101 = scmp.ne.s32.totalorder %s92, %s93
      %p102 = scmp.eq.s32.totalorder %s26, 0
      %p103 = por %p101, %p102
      %p104 = scmp.ne.s32.totalorder %s92, %s93
      %p105 = scmp.eq.s32.totalorder %s27, 1
      %p106 = por %p104, %p105
      %p108 = scmp.ne.s32.totalorder %s93, %s107
      %p109 = scmp.eq.s32.totalorder %s27, 0
      %p110 = por %p108, %p109
      %s112 = sadd.s32 %s111, 1
      %p115 = scmp.eq.s32.totalorder %s21, 1
      %p116 = scmp.ne.s32.totalorder %s111, %s113
      %p117 = scmp.eq.s32.totalorder %s21, 0
      %p118 = por %p116, %p117
      %p119 = scmp.ne.s32.totalorder %s111, %s113
      %p120 = scmp.eq.s32.totalorder %s26, 1
      %p121 = por %p119, %p120
      %p122 = scmp.ne.s32.totalorder %s113, %s114
      %p123 = scmp.eq.s32.totalorder %s26, 0
      %p124 = por %p122, %p123
      %p125 = scmp.ne.s32.totalorder %s113, %s114
      %p126 = scmp.eq.s32.totalorder %s27, 1
      %p127 = por %p125, %p126
      %p129 = scmp.ne.s32.totalorder %s114, %s128
      %p130 = scmp.eq.s32.totalorder %s27, 0
      %p131 = por %p129, %p130
      %s133 = sadd.s32 %s132, 1
      %p136 = scmp.eq.s32.totalorder %s21, 1
      %p137 = scmp.ne.s32.totalorder %s132, %s134
      %p138 = scmp.eq.s32.totalorder %s21, 0
      %p139 = por %p137, %p138
      %p140 = scmp.ne.s32.totalorder %s132, %s134
      %p141 = scmp.eq.s32.totalorder %s26, 1
      %p142 = por %p140, %p141
      %p143 = scmp.ne.s32.totalorder %s134, %s135
      %p144 = scmp.eq.s32.totalorder %s26, 0
      %p145 = por %p143, %p144
      %p146 = scmp.ne.s32.totalorder %s134, %s135
      %p147 = scmp.eq.s32.totalorder %s27, 1
      %p148 = por %p146, %p147
      %p150 = scmp.ne.s32.totalorder %s135, %s149
      %p151 = scmp.eq.s32.totalorder %s27, 0
      %p152 = por %p150, %p151
      %s154 = sadd.s32 %s153, 1
      %p157 = scmp.eq.s32.totalorder %s21, 1
      %p158 = scmp.ne.s32.totalorder %s153, %s155
      %p159 = scmp.eq.s32.totalorder %s21, 0
      %p160 = por %p158, %p159
      %p161 = scmp.ne.s32.totalorder %s153, %s155
      %p162 = scmp.eq.s32.totalorder %s26, 1
      %p163 = por %p161, %p162
      %p164 = scmp.ne.s32.totalorder %s155, %s156
      %p165 = scmp.eq.s32.totalorder %s26, 0
      %p166 = por %p164, %p165
      %p167 = scmp.ne.s32.totalorder %s155, %s156
      %p168 = scmp.eq.s32.totalorder %s27, 1
      %p169 = por %p167, %p168
      %p171 = scmp.ne.s32.totalorder %s156, %s170
      %p172 = scmp.eq.s32.totalorder %s27, 0
      %p173 = por %p171, %p172
      %s175 = sadd.s32 %s174, 1
      %p178 = scmp.eq.s32.totalorder %s21, 1
      %p179 = scmp.ne.s32.totalorder %s174, %s176
      %p180 = scmp.eq.s32.totalorder %s21, 0
      %p181 = por %p179, %p180
      %p182 = scmp.ne.s32.totalorder %s174, %s176
      %p183 = scmp.eq.s32.totalorder %s26, 1
      %p184 = por %p182, %p183
      %p185 = scmp.ne.s32.totalorder %s176, %s177
      %p186 = scmp.eq.s32.totalorder %s26, 0
      %p187 = por %p185, %p186
      %p188 = scmp.ne.s32.totalorder %s176, %s177
      %p189 = scmp.eq.s32.totalorder %s27, 1
      %p190 = por %p188, %p189
      %p192 = scmp.ne.s32.totalorder %s177, %s191
      %p193 = scmp.eq.s32.totalorder %s27, 0
      %p194 = por %p192, %p193
      %s195 = ssub.s32 %s28, %s40
      %s196 = ssub.s32 %s29, %s36
      %s197 = sor.u32 %s195, %s196
      %p198 = scmp.eq.s32.totalorder %s197, 0
      %s200 = sadd.s32 %s199, 1
      %s201 = scalar_select %p198, %s199, %s200
      %p204 = pneg %p198
      %p205 = scmp.eq.s32.totalorder %s21, 1
      %p206 = por %p204, %p205
      %p207 = scmp.ne.s32.totalorder %s199, %s202
      %p208 = scmp.eq.s32.totalorder %s21, 0
      %p209 = por %p207, %p208
      %p210 = scmp.ne.s32.totalorder %s199, %s202
      %p211 = scmp.eq.s32.totalorder %s26, 1
      %p212 = por %p210, %p211
      %p213 = scmp.ne.s32.totalorder %s202, %s203
      %p214 = scmp.eq.s32.totalorder %s26, 0
      %p215 = por %p213, %p214
      %p216 = scmp.ne.s32.totalorder %s202, %s203
      %p217 = scmp.eq.s32.totalorder %s27, 1
      %p218 = por %p216, %p217
      %p220 = scmp.ne.s32.totalorder %s203, %s219
      %p221 = scmp.eq.s32.totalorder %s27, 0
      %p222 = por %p220, %p221
      %p223 = scmp.le.s32.totalorder 1, %s21
      %p224 = scmp.lt.s32.totalorder %s21, 3
      %p225 = pnand %p223, %p224
      %p226 = pneg %p225
      // Predicated region
      $region9: #{rwkv_block.1} parent=5 // pred_check
        _
      $region10: #{rwkv_block.1} parent=5 // pred_check_branch
        %228 = sbr.rel (%p225) target = $region12
      $region11: #{rwkv_block.1} parent=5 // pred_region
        %s229 = ssub.s32 %s21, 1
        // Predicated region
        $region13: #{rwkv_block.1} parent=11 // pred_check
          %p230 = pneg %p82
        $region14: #{rwkv_block.1} parent=11 // pred_check_branch
          %232 = sbr.rel (%p230) target = $region16
        $region15: #{rwkv_block.1} parent=11 // pred_region
          %s234 = ssub.s32 256, 256
          %235 = vsyncadd [#allocation10], %s234
          %s236 = sshll.u32 [#allocation9], 4
          %s237 = int_to_ptr.vmem [resolvable:$true] %s236
          %242 = dma.hbm_to_vmem [thread:$0]  %s1, 256, %s237, [#allocation10], 128, 128, 8
        $region16: #{rwkv_block.1} parent=11 // pred_fallthru
          _
        // Predicated region
        $region17: #{rwkv_block.1} parent=11 // pred_check
          %p243 = pneg %p103
        $region18: #{rwkv_block.1} parent=11 // pred_check_branch
          %245 = sbr.rel (%p243) target = $region20
        $region19: #{rwkv_block.1} parent=11 // pred_region
          _
        $region20: #{rwkv_block.1} parent=11 // pred_fallthru
          _
        // Predicated region
        $region21: #{rwkv_block.1} parent=11 // pred_check
          %p246 = pneg %p124
        $region22: #{rwkv_block.1} parent=11 // pred_check_branch
          %248 = sbr.rel (%p246) target = $region24
        $region23: #{rwkv_block.1} parent=11 // pred_region
          _
        $region24: #{rwkv_block.1} parent=11 // pred_fallthru
          _
        // Predicated region
        $region25: #{rwkv_block.1} parent=11 // pred_check
          %p249 = pneg %p145
        $region26: #{rwkv_block.1} parent=11 // pred_check_branch
          %251 = sbr.rel (%p249) target = $region28
        $region27: #{rwkv_block.1} parent=11 // pred_region
          %s253 = ssub.s32 512, 512
          %254 = vsyncadd [#allocation10], %s253
          %s255 = sshll.u32 [#allocation11], 4
          %s256 = int_to_ptr.vmem [resolvable:$true] %s255
          %261 = dma.hbm_to_vmem [thread:$0]  %s4, 512, %s256, [#allocation10], 128, 128, 8
        $region28: #{rwkv_block.1} parent=11 // pred_fallthru
          _
        // Predicated region
        $region29: #{rwkv_block.1} parent=11 // pred_check
          %p262 = pneg %p166
        $region30: #{rwkv_block.1} parent=11 // pred_check_branch
          %264 = sbr.rel (%p262) target = $region32
        $region31: #{rwkv_block.1} parent=11 // pred_region
          %s266 = ssub.s32 1024, 1024
          %267 = vsyncadd [#allocation13], %s266
          %s268 = sshll.u32 [#allocation12], 4
          %s269 = int_to_ptr.vmem [resolvable:$true] %s268
          %274 = dma.hbm_to_vmem [thread:$0]  %s5, 1024, %s269, [#allocation13], 128, 128, 8
        $region32: #{rwkv_block.1} parent=11 // pred_fallthru
          _
        // Predicated region
        $region33: #{rwkv_block.1} parent=11 // pred_check
          %p275 = pneg %p187
        $region34: #{rwkv_block.1} parent=11 // pred_check_branch
          %277 = sbr.rel (%p275) target = $region36
        $region35: #{rwkv_block.1} parent=11 // pred_region
          _
        $region36: #{rwkv_block.1} parent=11 // pred_fallthru
          _
      $region12: #{rwkv_block.1} parent=5 // pred_fallthru
        _
      %p278 = scmp.lt.s32.totalorder %s21, 2
      // Predicated region
      $region37: #{rwkv_block.1} parent=5 // pred_check
        %p279 = pneg %p278
      $region38: #{rwkv_block.1} parent=5 // pred_check_branch
        %281 = sbr.rel (%p279) target = $region40
      $region39: #{rwkv_block.1} parent=5 // pred_region
        // Predicated region
        $region41: #{rwkv_block.1} parent=39 // pred_check
          %p282 = pneg %p55
        $region42: #{rwkv_block.1} parent=39 // pred_check_branch
          %284 = sbr.rel (%p282) target = $region44
        $region43: #{rwkv_block.1} parent=39 // pred_region
          %s285 = sand.u32 %s45, 1
          %s286 = scalar_lea.sflag [#allocation7], %s285
          %s287 = sand.u32 %s45, 1
          %s288 = smul.addr %s287, 8
          %s289 = scalar_lea.vmem [#allocation6], %s288
          %s291 = ssub.s32 128, 128
          %292 = vsyncadd %s286, %s291
          %s293 = sadd.s32 %s29, %s28
          %s294 = smul.addr %s293, 128
          %s295 = scalar_lea.hbm %s0, %s294
          %s297 = sshll.u32 %s289, 4
          %s298 = int_to_ptr.vmem [resolvable:$true] %s297
          %300 = dma.hbm_to_vmem [thread:$0]  %s295, 128, %s298, %s286
        $region44: #{rwkv_block.1} parent=39 // pred_fallthru
          _
      $region40: #{rwkv_block.1} parent=5 // pred_fallthru
        _
      %p301 = scmp.le.s32.totalorder 1, %s21
      %p302 = scmp.lt.s32.totalorder %s21, 3
      %p303 = pnand %p301, %p302
      %p304 = pneg %p303
      // Predicated region
      $region45: #{rwkv_block.1} parent=5 // pred_check
        _
      $region46: #{rwkv_block.1} parent=5 // pred_check_branch
        %306 = sbr.rel (%p303) target = $region48
      $region47: #{rwkv_block.1} parent=5 // pred_region
        %s307 = ssub.s32 %s21, 1
        %s308 = sand.u32 %s48, 1
        %s309 = scalar_lea.sflag [#allocation7], %s308
        %s310 = sand.u32 %s48, 1
        %s311 = smul.addr %s310, 8
        %s312 = scalar_lea.vmem [#allocation6], %s311
        // Predicated region
        $region49: #{rwkv_block.1} parent=47 // pred_check
          %p313 = pneg %p61
        $region50: #{rwkv_block.1} parent=47 // pred_check_branch
          %315 = sbr.rel (%p313) target = $region52
        $region51: #{rwkv_block.1} parent=47 // pred_region
          %316 = dma.done %s309, 128
        $region52: #{rwkv_block.1} parent=47 // pred_fallthru
          _
        // Predicated region
        $region53: #{rwkv_block.1} parent=47 // pred_check
          %p317 = pneg %p82
        $region54: #{rwkv_block.1} parent=47 // pred_check_branch
          %319 = sbr.rel (%p317) target = $region56
        $region55: #{rwkv_block.1} parent=47 // pred_region
          %320 = dma.done [#allocation10], 256
        $region56: #{rwkv_block.1} parent=47 // pred_fallthru
          _
        // Predicated region
        $region57: #{rwkv_block.1} parent=47 // pred_check
          %p321 = pneg %p145
        $region58: #{rwkv_block.1} parent=47 // pred_check_branch
          %323 = sbr.rel (%p321) target = $region60
        $region59: #{rwkv_block.1} parent=47 // pred_region
          %324 = dma.done [#allocation10], 512
        $region60: #{rwkv_block.1} parent=47 // pred_fallthru
          _
        // Predicated region
        $region61: #{rwkv_block.1} parent=47 // pred_check
          %p325 = pneg %p166
        $region62: #{rwkv_block.1} parent=47 // pred_check_branch
          %327 = sbr.rel (%p325) target = $region64
        $region63: #{rwkv_block.1} parent=47 // pred_region
          %328 = dma.done [#allocation13], 1024
        $region64: #{rwkv_block.1} parent=47 // pred_fallthru
          _
        %s329 = sand.u32 %s48, 1
        %s330 = scalar_lea.sflag [#allocation7], %s329
        %s331 = sand.u32 %s48, 1
        %s332 = smul.addr %s331, 8
        %s333 = scalar_lea.vmem [#allocation6], %s332
        %p334 = pneg %p61
        %p335 = pneg %p58
        %p336 = pneg %p82
        %p337 = pneg %p79
        %p338 = pneg %p103
        %p339 = pneg %p100
        %p340 = pneg %p124
        %p341 = pneg %p121
        %p342 = pneg %p145
        %p343 = pneg %p142
        %p344 = pneg %p166
        %p345 = pneg %p163
        %p346 = pneg %p187
        %p347 = pneg %p184
        %p348 = pneg %p215
        %p349 = pneg %p212
        %s350 = sand.u32 %s202, 1
        %s351 = scalar_lea.sflag [#allocation8], %s350
        %s352 = sand.u32 %s202, 1
        %s353 = smul.addr %s352, 8
        %s354 = scalar_lea.vmem [#allocation14], %s353
        %p355 = scmp.eq.s32.totalorder %s31, 0
        // Predicated region
        $region65: #{rwkv_block.1} parent=47 // pred_check
          %p356 = pneg %p355
        $region66: #{rwkv_block.1} parent=47 // pred_check_branch
          %358 = sbr.rel (%p356) target = $region68
        $region67: #{rwkv_block.1} parent=47 // pred_region
          %vm359 = vcmask 516096
          %360 = vst.msk [vmem:[#allocation3] sm:$0x1] %vm359, 0.0
          %vm361 = vcmask 253952
          %362 = vst.msk [vmem:[#allocation4] sm:$0x1] %vm361, 0.0
          %363 = vst.msk [vmem:[#allocation5] sm:$0x1] %vm361, 0.0
        $region68: #{rwkv_block.1} parent=47 // pred_fallthru
          _
        %v364 = vld [vmem:[%s312] sm:$0xff]
        %v365 = vld [vmem:[#allocation9] sm:$0x1]
        %v366 = vld [vmem:[#allocation9 + $0x1] sm:$0x1]
        %v367 = vld [vmem:[#allocation9 + $0x2] sm:$0x1]
        %v368 = vld [vmem:[#allocation9 + $0x3] sm:$0x1]
        %v369 = vld [vmem:[#allocation9 + $0x5] sm:$0x1]
        %v370 = vld [vmem:[#allocation9 + $0x9] sm:$0x1]
        %v371 = vld [vmem:[%s2] sm:$0xff]
        %v372 = vld [vmem:[%s2 + $0x8] sm:$0xff]
        %v373 = vld [vmem:[%s2 + $0x10] sm:$0x1]
        %v374 = vld [vmem:[%s2 + $0x11] sm:$0x1]
        %vm375 = vcmask 261120
        %v376 = vsel %vm375, %v364, 0.0
        %377 = vadd.xlane.f32.xlu0 %v376
        %v378 = vpop.xlane.xlu0 %377
        %v379 = vrcp.pop 32.0
        %v380 = vmul.f32 %v378, %v379
        %v381 = vsub.f32 %v364, %v380
        %v382 = vmul.f32 %v381, %v381
        %v383 = vsel %vm375, %v382, 0.0
        %384 = vadd.xlane.f32.xlu0 %v383
        %v385 = vpop.xlane.xlu0 %384
        %v386 = vmul.f32 %v385, %v379
        %v387 = vadd.f32 %v386, 1e-05
        %v388 = vrsqrt.pop %v387
        %v389 = vmul.f32 %v381, %v388
        %v390 = vlaneseq
        %v391 = vshrl.u32 %v390, 7
        %v392 = vsub.s32 0, %v391
        %v393 = vrot.slane %v365, %v392
        %v394 = vmul.f32 %v389, %v393
        %v395 = vlaneseq
        %v396 = vshrl.u32 %v395, 7
        %v397 = vsub.s32 0, %v396
        %v398 = vrot.slane %v366, %v397
        %v399 = vadd.f32 %v394, %v398
        %v400 = vld [vmem:[#allocation4] sm:$0x1]
        %v401 = vrot.slane %v399, 7
        %v402 = vlaneseq
        %v403 = vshrl.u32 %v402, 7
        %vm404 = vcmp.eq.s32.totalorder %v403, 0
        %v406 = vlaneseq
        %v407 = vshrl.u32 %v406, 7
        %v408 = vsub.s32 0, %v407
        %v409 = vrot.slane %v400, %v408
        %v411 = vsel %vm404, %v409, %v401
        %vm412 = vcmask 261127
        %413 = vst.msk [vmem:[#allocation4 - $0x7] sm:$0x80] %vm412, %v399
        %415 = vrot.lane.b32.xlu0 %v411, 32
        %v416 = vpop.permute.xlu0 %415
        %v418 = vsel %vm375, %v399, %v416
        %v419 = vld [vmem:[%s3] sm:$0xff]
        %v420 = vld [vmem:[%s3 + $0x8] sm:$0xff]
        %v421 = vld [vmem:[%s3 + $0x10] sm:$0xff]
        %v422 = vld [vmem:[%s3 + $0x18] sm:$0xff]
        %v423 = vld [vmem:[%s3 + $0x20] sm:$0xff]
        %v424 = vld [vmem:[%s3 + $0x28] sm:$0xff]
        %v425 = vld [vmem:[%s3 + $0x30] sm:$0xff]
        %v426 = vld [vmem:[%s3 + $0x38] sm:$0xff]
        %vm427 = vcmask 523264
        %v429 = vsel %vm427, %v418, 0
        %431 = vmatprep.subr.mxu0 0.0
        %432 = vmatpush1.msra.mxu0 %v419
        %433 = vmatprep.subr.mxu0 0.0
        %434 = vmatpush1.msra.mxu0 %v420
        %435 = vmatprep.subr.mxu0 0.0
        %436 = vmatpush1.msra.mxu0 %v421
        %437 = vmatprep.subr.mxu0 0.0
        %438 = vmatpush1.msra.mxu0 %v422
        %439 = vmatprep.subr.mxu0 0.0
        %440 = vmatpush1.msra.mxu0 %v423
        %441 = vmatprep.subr.mxu0 0.0
        %442 = vmatpush1.msra.mxu0 %v424
        %443 = vmatprep.subr.mxu0 0.0
        %444 = vmatpush1.msra.mxu0 %v425
        %445 = vmatprep.subr.mxu0 0.0
        %446 = vmatpush1.msra.mxu0 %v426
        %447 = vmatprep.subr.mxu0 0.0
        %448 = vmatpush1.msra.mxu0 0.0
        %449 = vmatprep.subr.mxu0 0.0
        %450 = vmatpush1.msra.mxu0 0.0
        %451 = vmatprep.subr.mxu0 0.0
        %452 = vmatpush1.msra.mxu0 0.0
        %453 = vmatprep.subr.mxu0 0.0
        %454 = vmatpush1.msra.mxu0 0.0
        %455 = vmatprep.subr.mxu0 0.0
        %456 = vmatpush1.msra.mxu0 0.0
        %457 = vmatprep.subr.mxu0 0.0
        %458 = vmatpush1.msra.mxu0 0.0
        %459 = vmatprep.subr.mxu0 0.0
        %460 = vmatpush1.msra.mxu0 0.0
        %461 = vmatprep.subr.mxu0 0.0
        %462 = vmatpush1.msra.mxu0 0.0
        %463 = vmatprep.subr.mxu0 0.0
        %464 = vmatpush1.msra.mxu0 0.0
        %465 = vmatprep.subr.mxu0 0.0
        %466 = vmatpush1.msra.mxu0 0.0
        %467 = vmatprep.subr.mxu0 0.0
        %468 = vmatpush1.msra.mxu0 0.0
        %469 = vmatprep.subr.mxu0 0.0
        %470 = vmatpush1.msra.mxu0 0.0
        %471 = vmatprep.subr.mxu0 0.0
        %472 = vmatpush1.msra.mxu0 0.0
        %473 = vmatprep.subr.mxu0 0.0
        %474 = vmatpush1.msra.mxu0 0.0
        %475 = vmatprep.subr.mxu0 0.0
        %476 = vmatpush1.msra.mxu0 0.0
        %477 = vmatprep.subr.mxu0 0.0
        %478 = vmatpush1.msra.mxu0 0.0
        %479 = vmatprep.subr.mxu0 0.0
        %480 = vmatpush1.msra.mxu0 0.0
        %481 = vmatprep.subr.mxu0 0.0
        %482 = vmatpush1.msra.mxu0 0.0
        %483 = vmatprep.subr.mxu0 0.0
        %484 = vmatpush1.msra.mxu0 0.0
        %485 = vmatprep.subr.mxu0 0.0
        %486 = vmatpush1.msra.mxu0 0.0
        %487 = vmatprep.subr.mxu0 0.0
        %488 = vmatpush1.msra.mxu0 0.0
        %489 = vmatprep.subr.mxu0 0.0
        %490 = vmatpush1.msra.mxu0 0.0
        %491 = vmatprep.subr.mxu0 0.0
        %492 = vmatpush1.msra.mxu0 0.0
        %493 = vmatprep.subr.mxu0 0.0
        %494 = vmatpush1.msra.mxu0 0.0
        %495 = vmatprep.mubr.f32.mxu0 0.0
        %496 = vmatmul.mubr.f32.gmra.mrb[0].mxu0 %v429
        %v497 = vpop.f32.mrb[0].mxu0
        %v498 = vadd.f32 0.0, %v497
        %v499 = vpop.f32.mrb[0].mxu0
        %500 = vdwg.mxu0
        %v501 = vmax.f32 %v498, -60.0
        %v502 = vmin.f32 %v501, 30.0
        %v503 = vxor.u32 %v498, 2147483648
        %v504 = vmul.f32 %v503, 1.442695
        %v505 = vpow.pop %v504
        %v506 = vadd.f32 %v505, 1.0
        %v507 = vrcp.pop %v506
        %v508 = vmul.f32 1.0, %v507
        %v509 = vmul.f32 %v502, 1.442695
        %v510 = vpow.pop %v509
        %512 = vrot.lane.b32.xlu0 %v498, 96
        %v513 = vpop.permute.xlu0 %512
        %v515 = vmul.f32 %v510, %v513
        %517 = vrot.lane.b32.xlu0 %v510, 32
        %v518 = vpop.permute.xlu0 %517
        %v520 = vsel %vm375, %v515, %v518
        %v521 = vmul.f32 %v520, %v372
        %v522 = vlaneseq
        %v523 = vand.u32 %v522, 127
        %v524 = vshra.s32 %v403, 3
        %v525 = vshra.s32 %v523, 3
        %vm526 = vcmp.eq.s32.totalorder %v524, %v525
        %vm527 = vcmp.lt.s32.totalorder %v523, %v403
        %vm528 = vmand %vm527, %vm526
        %v529 = vsel %vm528, 1.0, 0.0
        %vm530 = vcmask 64512
        %v532 = vsel %vm530, %v529, 0
        %534 = vmatprep.subr.mxu0 0.0
        %535 = vmatpush1.msra.mxu0 %v521
        %536 = vmatprep.subr.mxu0 0.0
        %537 = vmatpush1.msra.mxu0 0.0
        %538 = vmatprep.subr.mxu0 0.0
        %539 = vmatpush1.msra.mxu0 0.0
        %540 = vmatprep.subr.mxu0 0.0
        %541 = vmatpush1.msra.mxu0 0.0
        %542 = vmatprep.subr.mxu0 0.0
        %543 = vmatpush1.msra.mxu0 0.0
        %544 = vmatprep.subr.mxu0 0.0
        %545 = vmatpush1.msra.mxu0 0.0
        %546 = vmatprep.subr.mxu0 0.0
        %547 = vmatpush1.msra.mxu0 0.0
        %548 = vmatprep.subr.mxu0 0.0
        %549 = vmatpush1.msra.mxu0 0.0
        %550 = vmatprep.subr.mxu0 0.0
        %551 = vmatpush1.msra.mxu0 0.0
        %552 = vmatprep.subr.mxu0 0.0
        %553 = vmatpush1.msra.mxu0 0.0
        %554 = vmatprep.subr.mxu0 0.0
        %555 = vmatpush1.msra.mxu0 0.0
        %556 = vmatprep.subr.mxu0 0.0
        %557 = vmatpush1.msra.mxu0 0.0
        %558 = vmatprep.subr.mxu0 0.0
        %559 = vmatpush1.msra.mxu0 0.0
        %560 = vmatprep.subr.mxu0 0.0
        %561 = vmatpush1.msra.mxu0 0.0
        %562 = vmatprep.subr.mxu0 0.0
        %563 = vmatpush1.msra.mxu0 0.0
        %564 = vmatprep.subr.mxu0 0.0
        %565 = vmatpush1.msra.mxu0 0.0
        %566 = vmatprep.subr.mxu0 0.0
        %567 = vmatpush1.msra.mxu0 0.0
        %568 = vmatprep.subr.mxu0 0.0
        %569 = vmatpush1.msra.mxu0 0.0
        %570 = vmatprep.subr.mxu0 0.0
        %571 = vmatpush1.msra.mxu0 0.0
        %572 = vmatprep.subr.mxu0 0.0
        %573 = vmatpush1.msra.mxu0 0.0
        %574 = vmatprep.subr.mxu0 0.0
        %575 = vmatpush1.msra.mxu0 0.0
        %576 = vmatprep.subr.mxu0 0.0
        %577 = vmatpush1.msra.mxu0 0.0
        %578 = vmatprep.subr.mxu0 0.0
        %579 = vmatpush1.msra.mxu0 0.0
        %580 = vmatprep.subr.mxu0 0.0
        %581 = vmatpush1.msra.mxu0 0.0
        %582 = vmatprep.subr.mxu0 0.0
        %583 = vmatpush1.msra.mxu0 0.0
        %584 = vmatprep.subr.mxu0 0.0
        %585 = vmatpush1.msra.mxu0 0.0
        %586 = vmatprep.subr.mxu0 0.0
        %587 = vmatpush1.msra.mxu0 0.0
        %588 = vmatprep.subr.mxu0 0.0
        %589 = vmatpush1.msra.mxu0 0.0
        %590 = vmatprep.subr.mxu0 0.0
        %591 = vmatpush1.msra.mxu0 0.0
        %592 = vmatprep.subr.mxu0 0.0
        %593 = vmatpush1.msra.mxu0 0.0
        %594 = vmatprep.subr.mxu0 0.0
        %595 = vmatpush1.msra.mxu0 0.0
        %596 = vmatprep.subr.mxu0 0.0
        %597 = vmatpush1.msra.mxu0 0.0
        %598 = vmatprep.mubr.f32.mxu0 0.0
        %599 = vmatmul.mubr.f32.gmra.mrb[0].mxu0 %v532
        %v600 = vpop.f32.mrb[0].mxu0
        %v601 = vadd.f32 0.0, %v600
        %v602 = vpop.f32.mrb[0].mxu0
        %603 = vdwg.mxu0
        %v604 = vsel %vm427, %v521, 0.0
        %v605 = vrot.slane %v604, 4
        %v606 = vadd.f32 %v604, %v605
        %v607 = vrot.slane %v606, 2
        %v608 = vadd.f32 %v606, %v607
        %v609 = vrot.slane %v608, 1
        %v610 = vadd.f32 %v608, %v609
        %v611 = vld [vmem:[#allocation3] sm:$0x1]
        %vm612 = vcmask 516096
        %613 = vst.msk [vmem:[#allocation2] sm:$0x1] %vm612, %v611
        %v614 = vmul.f32 %v373, %v610
        %v615 = vadd.f32 %v611, %v614
        %v616 = vmul.f32 %v374, %v615
        %617 = vst.msk [vmem:[#allocation3] sm:$0x1] %vm612, %v616
        %v618 = vld [vmem:[#allocation2] sm:$0x1]
        %v619 = vlaneseq
        %v620 = vshrl.u32 %v619, 7
        %v621 = vsub.s32 0, %v620
        %v622 = vrot.slane %v373, %v621
        %v623 = vmul.f32 %v622, %v601
        %v625 = vlaneseq
        %v626 = vshrl.u32 %v625, 7
        %v627 = vsub.s32 0, %v626
        %v628 = vrot.slane %v618, %v627
        %v630 = vadd.f32 %v628, %v623
        %v631 = vmul.f32 %v371, %v630
        %v632 = vlaneseq
        %v633 = vshrl.u32 %v632, 7
        %v634 = vsub.s32 0, %v633
        %v635 = vrot.slane %v369, %v634
        %v636 = vmul.f32 %v510, %v635
        %v637 = vmul.f32 %v636, %v513
        %v638 = vadd.f32 %v631, %v637
        %640 = vrot.lane.b32.xlu0 %v636, 32
        %v641 = vpop.permute.xlu0 %640
        %v643 = vadd.f32 %v631, %v641
        %v644 = vrcp.pop %v643
        %646 = vrot.lane.b32.xlu0 %v644, 96
        %v647 = vpop.permute.xlu0 %646
        %v649 = vmul.f32 %v638, %v647
        %651 = vrot.lane.b32.xlu0 %v649, 64
        %v652 = vpop.permute.xlu0 %651
        %v654 = vmul.f32 %v508, %v652
        %v655 = vld [vmem:[#allocation11] sm:$0xff]
        %v656 = vld [vmem:[#allocation11 + $0x8] sm:$0xff]
        %v657 = vld [vmem:[#allocation11 + $0x10] sm:$0xff]
        %v658 = vld [vmem:[#allocation11 + $0x18] sm:$0xff]
        %v659 = vlaneseq
        %v660 = vshrl.u32 %v659, 7
        %v661 = vsub.s32 0, %v660
        %v662 = vrot.slane %v370, %v661
        %664 = vrot.lane.b32.xlu0 %v654, 64
        %v665 = vpop.permute.xlu0 %664
        %v666 = vsel %vm375, %v665, 0
        %668 = vmatprep.subr.mxu0 0.0
        %669 = vmatpush1.msra.mxu0 %v655
        %670 = vmatprep.subr.mxu0 0.0
        %671 = vmatpush1.msra.mxu0 %v656
        %672 = vmatprep.subr.mxu0 0.0
        %673 = vmatpush1.msra.mxu0 %v657
        %674 = vmatprep.subr.mxu0 0.0
        %675 = vmatpush1.msra.mxu0 %v658
        %676 = vmatprep.subr.mxu0 0.0
        %677 = vmatpush1.msra.mxu0 0.0
        %678 = vmatprep.subr.mxu0 0.0
        %679 = vmatpush1.msra.mxu0 0.0
        %680 = vmatprep.subr.mxu0 0.0
        %681 = vmatpush1.msra.mxu0 0.0
        %682 = vmatprep.subr.mxu0 0.0
        %683 = vmatpush1.msra.mxu0 0.0
        %684 = vmatprep.subr.mxu0 0.0
        %685 = vmatpush1.msra.mxu0 0.0
        %686 = vmatprep.subr.mxu0 0.0
        %687 = vmatpush1.msra.mxu0 0.0
        %688 = vmatprep.subr.mxu0 0.0
        %689 = vmatpush1.msra.mxu0 0.0
        %690 = vmatprep.subr.mxu0 0.0
        %691 = vmatpush1.msra.mxu0 0.0
        %692 = vmatprep.subr.mxu0 0.0
        %693 = vmatpush1.msra.mxu0 0.0
        %694 = vmatprep.subr.mxu0 0.0
        %695 = vmatpush1.msra.mxu0 0.0
        %696 = vmatprep.subr.mxu0 0.0
        %697 = vmatpush1.msra.mxu0 0.0
        %698 = vmatprep.subr.mxu0 0.0
        %699 = vmatpush1.msra.mxu0 0.0
        %700 = vmatprep.subr.mxu0 0.0
        %701 = vmatpush1.msra.mxu0 0.0
        %702 = vmatprep.subr.mxu0 0.0
        %703 = vmatpush1.msra.mxu0 0.0
        %704 = vmatprep.subr.mxu0 0.0
        %705 = vmatpush1.msra.mxu0 0.0
        %706 = vmatprep.subr.mxu0 0.0
        %707 = vmatpush1.msra.mxu0 0.0
        %708 = vmatprep.subr.mxu0 0.0
        %709 = vmatpush1.msra.mxu0 0.0
        %710 = vmatprep.subr.mxu0 0.0
        %711 = vmatpush1.msra.mxu0 0.0
        %712 = vmatprep.subr.mxu0 0.0
        %713 = vmatpush1.msra.mxu0 0.0
        %714 = vmatprep.subr.mxu0 0.0
        %715 = vmatpush1.msra.mxu0 0.0
        %716 = vmatprep.subr.mxu0 0.0
        %717 = vmatpush1.msra.mxu0 0.0
        %718 = vmatprep.subr.mxu0 0.0
        %719 = vmatpush1.msra.mxu0 0.0
        %720 = vmatprep.subr.mxu0 0.0
        %721 = vmatpush1.msra.mxu0 0.0
        %722 = vmatprep.subr.mxu0 0.0
        %723 = vmatpush1.msra.mxu0 0.0
        %724 = vmatprep.subr.mxu0 0.0
        %725 = vmatpush1.msra.mxu0 0.0
        %726 = vmatprep.subr.mxu0 0.0
        %727 = vmatpush1.msra.mxu0 0.0
        %728 = vmatprep.subr.mxu0 0.0
        %729 = vmatpush1.msra.mxu0 0.0
        %730 = vmatprep.subr.mxu0 0.0
        %731 = vmatpush1.msra.mxu0 0.0
        %732 = vmatprep.mubr.f32.mxu0 0.0
        %733 = vmatmul.mubr.f32.gmra.mrb[0].mxu0 %v666
        %v734 = vpop.f32.mrb[0].mxu0
        %v735 = vadd.f32 %v662, %v734
        %v736 = vpop.f32.mrb[0].mxu0
        %737 = vdwg.mxu0
        %v738 = vadd.f32 %v364, %v735
        %v739 = vsel %vm375, %v738, 0.0
        %740 = vadd.xlane.f32.xlu0 %v739
        %v741 = vpop.xlane.xlu0 %740
        %v742 = vmul.f32 %v741, %v379
        %v743 = vsub.f32 %v738, %v742
        %v744 = vmul.f32 %v743, %v743
        %v745 = vsel %vm375, %v744, 0.0
        %746 = vadd.xlane.f32.xlu0 %v745
        %v747 = vpop.xlane.xlu0 %746
        %v748 = vmul.f32 %v747, %v379
        %v749 = vadd.f32 %v748, 1e-05
        %v750 = vrsqrt.pop %v749
        %v751 = vmul.f32 %v743, %v750
        %v752 = vlaneseq
        %v753 = vshrl.u32 %v752, 7
        %v754 = vsub.s32 0, %v753
        %v755 = vrot.slane %v367, %v754
        %v756 = vmul.f32 %v751, %v755
        %v757 = vlaneseq
        %v758 = vshrl.u32 %v757, 7
        %v759 = vsub.s32 0, %v758
        %v760 = vrot.slane %v368, %v759
        %v761 = vadd.f32 %v756, %v760
        %v762 = vld [vmem:[#allocation5] sm:$0x1]
        %v763 = vrot.slane %v761, 7
        %v765 = vlaneseq
        %v766 = vshrl.u32 %v765, 7
        %v767 = vsub.s32 0, %v766
        %v768 = vrot.slane %v762, %v767
        %v770 = vsel %vm404, %v768, %v763
        %771 = vst.msk [vmem:[#allocation5 - $0x7] sm:$0x80] %vm412, %v761
        %773 = vrot.lane.b32.xlu0 %v770, 32
        %v774 = vpop.permute.xlu0 %773
        %v776 = vsel %vm375, %v761, %v774
        %v777 = vld [vmem:[#allocation12] sm:$0xff]
        %v778 = vld [vmem:[#allocation12 + $0x8] sm:$0xff]
        %v779 = vld [vmem:[#allocation12 + $0x10] sm:$0xff]
        %v780 = vld [vmem:[#allocation12 + $0x18] sm:$0xff]
        %v781 = vld [vmem:[#allocation12 + $0x20] sm:$0xff]
        %v782 = vld [vmem:[#allocation12 + $0x28] sm:$0xff]
        %v783 = vld [vmem:[#allocation12 + $0x30] sm:$0xff]
        %v784 = vld [vmem:[#allocation12 + $0x38] sm:$0xff]
        %v786 = vsel %vm427, %v776, 0
        %788 = vmatprep.subr.mxu0 0.0
        %789 = vmatpush1.msra.mxu0 %v777
        %790 = vmatprep.subr.mxu0 0.0
        %791 = vmatpush1.msra.mxu0 %v778
        %792 = vmatprep.subr.mxu0 0.0
        %793 = vmatpush1.msra.mxu0 %v779
        %794 = vmatprep.subr.mxu0 0.0
        %795 = vmatpush1.msra.mxu0 %v780
        %796 = vmatprep.subr.mxu0 0.0
        %797 = vmatpush1.msra.mxu0 %v781
        %798 = vmatprep.subr.mxu0 0.0
        %799 = vmatpush1.msra.mxu0 %v782
        %800 = vmatprep.subr.mxu0 0.0
        %801 = vmatpush1.msra.mxu0 %v783
        %802 = vmatprep.subr.mxu0 0.0
        %803 = vmatpush1.msra.mxu0 %v784
        %804 = vmatprep.subr.mxu0 0.0
        %805 = vmatpush1.msra.mxu0 0.0
        %806 = vmatprep.subr.mxu0 0.0
        %807 = vmatpush1.msra.mxu0 0.0
        %808 = vmatprep.subr.mxu0 0.0
        %809 = vmatpush1.msra.mxu0 0.0
        %810 = vmatprep.subr.mxu0 0.0
        %811 = vmatpush1.msra.mxu0 0.0
        %812 = vmatprep.subr.mxu0 0.0
        %813 = vmatpush1.msra.mxu0 0.0
        %814 = vmatprep.subr.mxu0 0.0
        %815 = vmatpush1.msra.mxu0 0.0
        %816 = vmatprep.subr.mxu0 0.0
        %817 = vmatpush1.msra.mxu0 0.0
        %818 = vmatprep.subr.mxu0 0.0
        %819 = vmatpush1.msra.mxu0 0.0
        %820 = vmatprep.subr.mxu0 0.0
        %821 = vmatpush1.msra.mxu0 0.0
        %822 = vmatprep.subr.mxu0 0.0
        %823 = vmatpush1.msra.mxu0 0.0
        %824 = vmatprep.subr.mxu0 0.0
        %825 = vmatpush1.msra.mxu0 0.0
        %826 = vmatprep.subr.mxu0 0.0
        %827 = vmatpush1.msra.mxu0 0.0
        %828 = vmatprep.subr.mxu0 0.0
        %829 = vmatpush1.msra.mxu0 0.0
        %830 = vmatprep.subr.mxu0 0.0
        %831 = vmatpush1.msra.mxu0 0.0
        %832 = vmatprep.subr.mxu0 0.0
        %833 = vmatpush1.msra.mxu0 0.0
        %834 = vmatprep.subr.mxu0 0.0
        %835 = vmatpush1.msra.mxu0 0.0
        %836 = vmatprep.subr.mxu0 0.0
        %837 = vmatpush1.msra.mxu0 0.0
        %838 = vmatprep.subr.mxu0 0.0
        %839 = vmatpush1.msra.mxu0 0.0
        %840 = vmatprep.subr.mxu0 0.0
        %841 = vmatpush1.msra.mxu0 0.0
        %842 = vmatprep.subr.mxu0 0.0
        %843 = vmatpush1.msra.mxu0 0.0
        %844 = vmatprep.subr.mxu0 0.0
        %845 = vmatpush1.msra.mxu0 0.0
        %846 = vmatprep.subr.mxu0 0.0
        %847 = vmatpush1.msra.mxu0 0.0
        %848 = vmatprep.subr.mxu0 0.0
        %849 = vmatpush1.msra.mxu0 0.0
        %850 = vmatprep.subr.mxu0 0.0
        %851 = vmatpush1.msra.mxu0 0.0
        %852 = vmatprep.mubr.f32.mxu0 0.0
        %853 = vmatmul.mubr.f32.gmra.mrb[0].mxu0 %v786
        %v854 = vpop.f32.mrb[0].mxu0
        %v855 = vadd.f32 0.0, %v854
        %v856 = vpop.f32.mrb[0].mxu0
        %857 = vdwg.mxu0
        %v858 = vmax.f32 %v855, 0.0
        %v859 = vxor.u32 %v855, 2147483648
        %v860 = vmul.f32 %v859, 1.442695
        %v861 = vpow.pop %v860
        %v862 = vadd.f32 %v861, 1.0
        %v863 = vrcp.pop %v862
        %v864 = vmul.f32 1.0, %v863
        %v865 = vmul.f32 %v858, %v858
        %v866 = vld [vmem:[%s6] sm:$0xff]
        %v867 = vld [vmem:[%s6 + $0x8] sm:$0xff]
        %v868 = vld [vmem:[%s6 + $0x10] sm:$0xff]
        %v869 = vld [vmem:[%s6 + $0x18] sm:$0xff]
        %v871 = vsel %vm375, %v865, 0
        %873 = vmatprep.subr.mxu0 0.0
        %874 = vmatpush1.msra.mxu0 %v866
        %875 = vmatprep.subr.mxu0 0.0
        %876 = vmatpush1.msra.mxu0 %v867
        %877 = vmatprep.subr.mxu0 0.0
        %878 = vmatpush1.msra.mxu0 %v868
        %879 = vmatprep.subr.mxu0 0.0
        %880 = vmatpush1.msra.mxu0 %v869
        %881 = vmatprep.subr.mxu0 0.0
        %882 = vmatpush1.msra.mxu0 0.0
        %883 = vmatprep.subr.mxu0 0.0
        %884 = vmatpush1.msra.mxu0 0.0
        %885 = vmatprep.subr.mxu0 0.0
        %886 = vmatpush1.msra.mxu0 0.0
        %887 = vmatprep.subr.mxu0 0.0
        %888 = vmatpush1.msra.mxu0 0.0
        %889 = vmatprep.subr.mxu0 0.0
        %890 = vmatpush1.msra.mxu0 0.0
        %891 = vmatprep.subr.mxu0 0.0
        %892 = vmatpush1.msra.mxu0 0.0
        %893 = vmatprep.subr.mxu0 0.0
        %894 = vmatpush1.msra.mxu0 0.0
        %895 = vmatprep.subr.mxu0 0.0
        %896 = vmatpush1.msra.mxu0 0.0
        %897 = vmatprep.subr.mxu0 0.0
        %898 = vmatpush1.msra.mxu0 0.0
        %899 = vmatprep.subr.mxu0 0.0
        %900 = vmatpush1.msra.mxu0 0.0
        %901 = vmatprep.subr.mxu0 0.0
        %902 = vmatpush1.msra.mxu0 0.0
        %903 = vmatprep.subr.mxu0 0.0
        %904 = vmatpush1.msra.mxu0 0.0
        %905 = vmatprep.subr.mxu0 0.0
        %906 = vmatpush1.msra.mxu0 0.0
        %907 = vmatprep.subr.mxu0 0.0
        %908 = vmatpush1.msra.mxu0 0.0
        %909 = vmatprep.subr.mxu0 0.0
        %910 = vmatpush1.msra.mxu0 0.0
        %911 = vmatprep.subr.mxu0 0.0
        %912 = vmatpush1.msra.mxu0 0.0
        %913 = vmatprep.subr.mxu0 0.0
        %914 = vmatpush1.msra.mxu0 0.0
        %915 = vmatprep.subr.mxu0 0.0
        %916 = vmatpush1.msra.mxu0 0.0
        %917 = vmatprep.subr.mxu0 0.0
        %918 = vmatpush1.msra.mxu0 0.0
        %919 = vmatprep.subr.mxu0 0.0
        %920 = vmatpush1.msra.mxu0 0.0
        %921 = vmatprep.subr.mxu0 0.0
        %922 = vmatpush1.msra.mxu0 0.0
        %923 = vmatprep.subr.mxu0 0.0
        %924 = vmatpush1.msra.mxu0 0.0
        %925 = vmatprep.subr.mxu0 0.0
        %926 = vmatpush1.msra.mxu0 0.0
        %927 = vmatprep.subr.mxu0 0.0
        %928 = vmatpush1.msra.mxu0 0.0
        %929 = vmatprep.subr.mxu0 0.0
        %930 = vmatpush1.msra.mxu0 0.0
        %931 = vmatprep.subr.mxu0 0.0
        %932 = vmatpush1.msra.mxu0 0.0
        %933 = vmatprep.subr.mxu0 0.0
        %934 = vmatpush1.msra.mxu0 0.0
        %935 = vmatprep.subr.mxu0 0.0
        %936 = vmatpush1.msra.mxu0 0.0
        %937 = vmatprep.mubr.f32.mxu0 0.0
        %938 = vmatmul.mubr.f32.gmra.mrb[0].mxu0 %v871
        %v939 = vpop.f32.mrb[0].mxu0
        %v940 = vadd.f32 0.0, %v939
        %v941 = vpop.f32.mrb[0].mxu0
        %942 = vdwg.mxu0
        %944 = vrot.lane.b32.xlu0 %v940, 32
        %v945 = vpop.permute.xlu0 %944
        %v947 = vmul.f32 %v864, %v945
        %949 = vrot.lane.b32.xlu0 %v738, 32
        %v950 = vpop.permute.xlu0 %949
        %v952 = vadd.f32 %v947, %v950
        %v953 = vadd.f32 %v952, %v950
        %955 = vrot.lane.b32.xlu0 %v953, 96
        %v956 = vpop.permute.xlu0 %955
        %958 = vst.msk [vmem:[%s354] sm:$0xff] %vm375, %v956
        %s959 = sand.u32 %s202, 1
        %s960 = scalar_lea.sflag [#allocation8], %s959
        %s961 = sand.u32 %s202, 1
        %s962 = smul.addr %s961, 8
        %s963 = scalar_lea.vmem [#allocation14], %s962
        // Predicated region
        $region69: #{rwkv_block.1} parent=47 // pred_check
          %p964 = pneg %p212
        $region70: #{rwkv_block.1} parent=47 // pred_check_branch
          %966 = sbr.rel (%p964) target = $region72
        $region71: #{rwkv_block.1} parent=47 // pred_region
          %s968 = ssub.s32 128, 128
          %969 = vsyncadd %s960, %s968
          %s970 = sadd.s32 %s31, %s30
          %s971 = smul.addr %s970, 128
          %s972 = scalar_lea.hbm %s7, %s971
          %s974 = sshll.u32 %s963, 4
          %s975 = int_to_ptr.vmem [resolvable:$true] %s974
          %977 = dma.vmem_to_hbm [thread:$0]  %s975, 128, %s972, %s960
        $region72: #{rwkv_block.1} parent=47 // pred_fallthru
          _
      $region48: #{rwkv_block.1} parent=5 // pred_fallthru
        _
      %p978 = scmp.le.s32.totalorder 2, %s21
      // Predicated region
      $region73: #{rwkv_block.1} parent=5 // pred_check
        %p979 = pneg %p978
      $region74: #{rwkv_block.1} parent=5 // pred_check_branch
        %981 = sbr.rel (%p979) target = $region76
      $region75: #{rwkv_block.1} parent=5 // pred_region
        %s982 = ssub.s32 %s21, 2
        // Predicated region
        $region77: #{rwkv_block.1} parent=75 // pred_check
          %p983 = pneg %p218
        $region78: #{rwkv_block.1} parent=75 // pred_check_branch
          %985 = sbr.rel (%p983) target = $region80
        $region79: #{rwkv_block.1} parent=75 // pred_region
          %s986 = sand.u32 %s203, 1
          %s987 = scalar_lea.sflag [#allocation8], %s986
          %s988 = sand.u32 %s203, 1
          %s989 = smul.addr %s988, 8
          %s990 = scalar_lea.vmem [#allocation14], %s989
          %991 = dma.done %s987, 128
        $region80: #{rwkv_block.1} parent=75 // pred_fallthru
          _
      $region76: #{rwkv_block.1} parent=5 // pred_fallthru
        _
    $region6: #{rwkv_block.1} parent=1 // loop_footer
      %s25 = sadd.s32 1, %s21
    $region7: #{rwkv_block.1} parent=1 // loop_footer_branch
      %20 = sbr.rel target = $region3
    $region8: #{rwkv_block.1} parent=1 // loop_exit
      _
    %992 = vsyncpa [#allocation7], 1
    %s993 = scalar_lea.sflag [#allocation7], 1
    %994 = vsyncpa %s993, 1
    %995 = vsyncpa [#allocation10], 1
    %996 = vsyncpa [#allocation13], 1
    %997 = vsyncpa [#allocation8], 1
    %s998 = scalar_lea.sflag [#allocation8], 1
    %999 = vsyncpa %s998, 1

</llo_original>
